<compile_context>
chip_gen: v7x
topology: tpu7x:2x2x1
jax: 0.10.0
libtpu: 0.0.40
codegen_flags: <defaults>
</compile_context>

<pallas_src>
import jax
import jax.numpy as jnp
import numpy as np
from jax.experimental import pallas as pl
from jax.experimental.pallas import tpu as pltpu

EPS = 1e-5  # PyTorch BatchNorm2d default eps


# ----------------------------- Pallas kernel --------------------------------

def rrcnn_kernel(x_ref, mask_ref, m1_ref, b1_ref,
                 mA_ref, sA_ref, tA_ref,
                 mB_ref, sB_ref, tB_ref, o_ref):
    NPp, WC = o_ref.shape          # padded row count, lane-dense width (=128)
    mask = mask_ref[...]           # (NPp, WC) f32, 0 on halo/pad rows

    # Conv_1x1: block-diagonal lane-dense matmul; halo/pad rows re-zeroed.
    y = (jnp.dot(x_ref[...], m1_ref[...],
                 preferred_element_type=jnp.float32) + b1_ref[...]) * mask

    def conv_bn_relu(u, m_ref, s_ref, t_ref):
        # u: (NPp, WC) f32 with zero halo/pad rows.
        # One wide matmul: dy = 0/1/2 stacked along the matmul N dimension.
        r = jnp.dot(u.astype(jnp.bfloat16), m_ref[...],
                    preferred_element_type=jnp.float32)        # (NPp, 3*WC)
        # out[p] = R0[p-1] + R1[p] + R2[p+1]; roll wraparound only lands on
        # halo/pad rows which the mask zeroes, so plain rotates are safe.
        s = (pltpu.roll(r[:, :WC], 1, axis=0)
             + r[:, WC:2 * WC]
             + pltpu.roll(r[:, 2 * WC:], NPp - 1, axis=0))
        # folded conv-bias + BatchNorm affine, ReLU, then re-zero halo rows.
        return jnp.maximum(s * s_ref[...] + t_ref[...], 0.0) * mask

    def recurrent_block(z, m_ref, s_ref, t_ref):
        # Recurrent_block.forward with t=2 -> three applications of the same conv
        x1 = conv_bn_relu(z, m_ref, s_ref, t_ref)
        x1 = conv_bn_relu(z + x1, m_ref, s_ref, t_ref)
        x1 = conv_bn_relu(z + x1, m_ref, s_ref, t_ref)
        return x1

    r = recurrent_block(y, mA_ref, sA_ref, tA_ref)
    r = recurrent_block(r, mB_ref, sB_ref, tB_ref)

    # residual connection; output slab is lane-dense -> unmasked stores
    o_ref[...] = (y + r).astype(o_ref.dtype)


# ------------------------------- Wrapper -------------------------------------

def _fold_bn(bias, gamma, beta, mean, var):
    s = gamma / jnp.sqrt(var + EPS)
    t = beta + (bias - mean) * s
    return s, t


def _banded_conv3x3_wide(w_hwio, W):
    """(3, 3, C, C) HWIO conv weight -> (W*C, 3*W*C) bf16 matrix.

    For each kernel row dy, block (w_in, w_out) equals w_hwio[dy, kw] with
    w_in = w_out + kw - 1 (zero padding along W handled by absent boundary
    blocks); the three dy matrices are concatenated along the output (N) axis
    so one matmul produces all three dy contributions."""
    mats = []
    for dy in range(3):
        m = sum(jnp.kron(jnp.eye(W, k=1 - kw, dtype=jnp.float32), w_hwio[dy, kw])
                for kw in range(3))
        mats.append(m)
    return jnp.concatenate(mats, axis=1).astype(jnp.bfloat16)


def rrcnn_block(x_nhwc, p):
    N, H, W, Cin = x_nhwc.shape
    Cout = p["w1"].shape[1]
    WC = W * Cout
    Hp2 = H + 2
    NP = N * Hp2
    NPp = ((NP + 7) // 8) * 8          # pad row count to a sublane multiple

    # fold conv bias + BN into per-channel scale/shift; tile over W (lane-dense)
    sA, tA = _fold_bn(p["bA"], p["gA"], p["betaA"], p["mA"], p["vA"])
    sB, tB = _fold_bn(p["bB"], p["gB"], p["betaB"], p["mB"], p["vB"])
    tile = lambda v: jnp.tile(v, W).reshape(1, WC).astype(jnp.float32)
    sAt, tAt, sBt, tBt, b1t = tile(sA), tile(tA), tile(sB), tile(tB), tile(p["b1"])

    # lane-dense weights: dy-stacked banded 3x3 matrices and block-diagonal 1x1
    mA = _banded_conv3x3_wide(p["wA"], W)                                   # (WC, 3*WC) bf16
    mB = _banded_conv3x3_wide(p["wB"], W)
    m1 = jnp.kron(jnp.eye(W, dtype=jnp.float32), p["w1"]).astype(jnp.bfloat16)  # (W*Cin, WC)

    # batch-folded, dy-padded input slab: per-image zero halo rows + pad rows,
    # passed in bf16 (matmul operand only).
    xp = jnp.pad(x_nhwc.reshape(N, H, W * Cin), ((0, 0), (1, 1), (0, 0)))
    xp = jnp.pad(xp.reshape(NP, W * Cin),
                 ((0, NPp - NP), (0, 0))).astype(jnp.bfloat16)

    # interior-row mask (1 on real image rows, 0 on halo / trailing pad rows)
    interior = jnp.zeros((N, Hp2), jnp.float32).at[:, 1:H + 1].set(1.0).reshape(NP)
    mask = jnp.pad(jnp.broadcast_to(interior[:, None], (NP, WC)),
                   ((0, NPp - NP), (0, 0)))

    out = pl.pallas_call(
        rrcnn_kernel,
        out_shape=jax.ShapeDtypeStruct((NPp, WC), jnp.float32),
    )(xp, mask, m1, b1t, mA, sAt, tAt, mB, sBt, tBt)

    # drop pad rows and per-image halo rows
    return out[:NP].reshape(N, Hp2, W, Cout)[:, 1:H + 1]


# ------------------------- Pure-JAX reference --------------------------------

def ref_forward(x, p):
    def cbr(z, w_hwio, bias, gamma, beta, mean, var):
        y = jax.lax.conv_general_dilated(
            z, w_hwio, window_strides=(1, 1), padding=((1, 1), (1, 1)),
            dimension_numbers=("NHWC", "HWIO", "NHWC")) + bias
        y = (y - mean) / jnp.sqrt(var + EPS) * gamma + beta
        return jnp.maximum(y, 0.0)

    def rblock(z, w, b, g, bt, m, v):
        x1 = cbr(z, w, b, g, bt, m, v)
        x1 = cbr(z + x1, w, b, g, bt, m, v)
        x1 = cbr(z + x1, w, b, g, bt, m, v)
        return x1

    y = jnp.einsum("nhwc,cd->nhwd", x, p["w1"]) + p["b1"]
    r = rblock(y, p["wA"], p["bA"], p["gA"], p["betaA"], p["mA"], p["vA"])
    r = rblock(r, p["wB"], p["bB"], p["gB"], p["betaB"], p["mB"], p["vB"])
    return y + r


# --------------------------------- Main ---------------------------------------

if __name__ == "__main__":
    N, Cin, Cout, H, W = 2, 4, 8, 16, 16

    key = jax.random.PRNGKey(0)
    ks = jax.random.split(key, 16)

    def nrm(k, shape, scale):
        return jax.random.normal(k, shape, jnp.float32) * scale

    params = {
        # Conv_1x1 (PyTorch weight (Cout,Cin,1,1) -> stored as (Cin,Cout))
        "w1": nrm(ks[0], (Cin, Cout), 1.0 / np.sqrt(Cin)),
        "b1": nrm(ks[1], (Cout,), 0.1),
        # Recurrent block A: conv3x3 (HWIO) + BN params / running stats
        "wA": nrm(ks[2], (3, 3, Cout, Cout), 1.0 / np.sqrt(9 * Cout)),
        "bA": nrm(ks[3], (Cout,), 0.1),
        "gA": jax.random.uniform(ks[4], (Cout,), jnp.float32, 0.8, 1.2),
        "betaA": nrm(ks[5], (Cout,), 0.1),
        "mA": nrm(ks[6], (Cout,), 0.1),
        "vA": jax.random.uniform(ks[7], (Cout,), jnp.float32, 0.5, 1.5),
        # Recurrent block B
        "wB": nrm(ks[8], (3, 3, Cout, Cout), 1.0 / np.sqrt(9 * Cout)),
        "bB": nrm(ks[9], (Cout,), 0.1),
        "gB": jax.random.uniform(ks[10], (Cout,), jnp.float32, 0.8, 1.2),
        "betaB": nrm(ks[11], (Cout,), 0.1),
        "mB": nrm(ks[12], (Cout,), 0.1),
        "vB": jax.random.uniform(ks[13], (Cout,), jnp.float32, 0.5, 1.5),
    }

    # PyTorch-style NCHW input, transposed to NHWC for the kernel
    x_nchw = jax.random.normal(ks[14], (N, Cin, H, W), jnp.float32)
    x_nhwc = jnp.transpose(x_nchw, (0, 2, 3, 1))

    out = rrcnn_block(x_nhwc, params)
    out = jax.block_until_ready(out)

    ref = ref_forward(x_nhwc, params)
    # kernel uses bf16 MXU operands (f32 accumulation) through 7 chained matmul
    # stages; reference runs full f32 -> loose tolerance
    np.testing.assert_allclose(np.asarray(out), np.asarray(ref), rtol=5e-2, atol=1e-1)

    out_nchw = jnp.transpose(out, (0, 3, 1, 2))  # back to PyTorch NCHW
    assert out_nchw.shape == (N, Cout, H, W)
    print("KERNEL_OK")
</pallas_src>

<mosaic_0001>
module attributes {stable_mosaic.version = 11 : i64} {
  func.func @rrcnn_kernel(%arg0: memref<40x64xbf16, #tpu.memory_space<vmem>>, %arg1: memref<40x128xf32, #tpu.memory_space<vmem>>, %arg2: memref<64x128xbf16, #tpu.memory_space<vmem>>, %arg3: memref<1x128xf32, #tpu.memory_space<vmem>>, %arg4: memref<128x384xbf16, #tpu.memory_space<vmem>>, %arg5: memref<1x128xf32, #tpu.memory_space<vmem>>, %arg6: memref<1x128xf32, #tpu.memory_space<vmem>>, %arg7: memref<128x384xbf16, #tpu.memory_space<vmem>>, %arg8: memref<1x128xf32, #tpu.memory_space<vmem>>, %arg9: memref<1x128xf32, #tpu.memory_space<vmem>>, %arg10: memref<40x128xf32, #tpu.memory_space<vmem>>) attributes {dimension_semantics = [], scalar_prefetch = 0 : i64, scratch_operands = 0 : i64, tpu.core_type = #tpu.core_type<tc>} {
    %c0 = arith.constant 0 : index
    %c0_0 = arith.constant 0 : index
    %0 = vector.load %arg1[%c0, %c0_0] : memref<40x128xf32, #tpu.memory_space<vmem>>, vector<40x128xf32>
    %c0_1 = arith.constant 0 : index
    %c0_2 = arith.constant 0 : index
    %1 = vector.load %arg0[%c0_1, %c0_2] : memref<40x64xbf16, #tpu.memory_space<vmem>>, vector<40x64xbf16>
    %c0_3 = arith.constant 0 : index
    %c0_4 = arith.constant 0 : index
    %2 = vector.load %arg2[%c0_3, %c0_4] : memref<64x128xbf16, #tpu.memory_space<vmem>>, vector<64x128xbf16>
    %cst = arith.constant dense<0.000000e+00> : vector<40x128xf32>
    %3 = tpu.matmul %1, %2, %cst {dimension_numbers = #tpu.dot_dimension_numbers<[1], [0], [0], [1], [0, 0, 1, 1], [], []>} : vector<40x64xbf16>, vector<64x128xbf16>, vector<40x128xf32> -> vector<40x128xf32>
    %c0_5 = arith.constant 0 : index
    %c0_6 = arith.constant 0 : index
    %4 = vector.load %arg3[%c0_5, %c0_6] : memref<1x128xf32, #tpu.memory_space<vmem>>, vector<1x128xf32>
    %5 = vector.broadcast %4 : vector<1x128xf32> to vector<40x128xf32>
    %6 = arith.addf %3, %5 : vector<40x128xf32>
    %7 = arith.mulf %6, %0 : vector<40x128xf32>
    %8 = arith.truncf %7 : vector<40x128xf32> to vector<40x128xbf16>
    %c0_7 = arith.constant 0 : index
    %c0_8 = arith.constant 0 : index
    %9 = vector.load %arg4[%c0_7, %c0_8] : memref<128x384xbf16, #tpu.memory_space<vmem>>, vector<128x384xbf16>
    %cst_9 = arith.constant dense<0.000000e+00> : vector<40x384xf32>
    %10 = tpu.matmul %8, %9, %cst_9 {dimension_numbers = #tpu.dot_dimension_numbers<[1], [0], [0], [1], [0, 0, 1, 1], [], []>} : vector<40x128xbf16>, vector<128x384xbf16>, vector<40x384xf32> -> vector<40x384xf32>
    %11 = vector.extract_strided_slice %10 {offsets = [0, 0], sizes = [40, 128], strides = [1, 1]} : vector<40x384xf32> to vector<40x128xf32>
    %c1_i32 = arith.constant 1 : i32
    %12 = tpu.dynamic_rotate %11 by %c1_i32 dim 0 : vector<40x128xf32>, i32 -> vector<40x128xf32>
    %13 = vector.extract_strided_slice %10 {offsets = [0, 128], sizes = [40, 128], strides = [1, 1]} : vector<40x384xf32> to vector<40x128xf32>
    %14 = arith.addf %12, %13 : vector<40x128xf32>
    %15 = vector.extract_strided_slice %10 {offsets = [0, 256], sizes = [40, 128], strides = [1, 1]} : vector<40x384xf32> to vector<40x128xf32>
    %c39_i32 = arith.constant 39 : i32
    %16 = tpu.dynamic_rotate %15 by %c39_i32 dim 0 : vector<40x128xf32>, i32 -> vector<40x128xf32>
    %17 = arith.addf %14, %16 : vector<40x128xf32>
    %c0_10 = arith.constant 0 : index
    %c0_11 = arith.constant 0 : index
    %18 = vector.load %arg5[%c0_10, %c0_11] : memref<1x128xf32, #tpu.memory_space<vmem>>, vector<1x128xf32>
    %19 = vector.broadcast %18 : vector<1x128xf32> to vector<40x128xf32>
    %20 = arith.mulf %17, %19 : vector<40x128xf32>
    %c0_12 = arith.constant 0 : index
    %c0_13 = arith.constant 0 : index
    %21 = vector.load %arg6[%c0_12, %c0_13] : memref<1x128xf32, #tpu.memory_space<vmem>>, vector<1x128xf32>
    %22 = vector.broadcast %21 : vector<1x128xf32> to vector<40x128xf32>
    %23 = arith.addf %20, %22 : vector<40x128xf32>
    %cst_14 = arith.constant 0.000000e+00 : f32
    %24 = vector.broadcast %cst_14 : f32 to vector<40x128xf32>
    %25 = arith.maximumf %23, %24 : vector<40x128xf32>
    %26 = arith.mulf %25, %0 : vector<40x128xf32>
    %27 = arith.addf %7, %26 : vector<40x128xf32>
    %28 = arith.truncf %27 : vector<40x128xf32> to vector<40x128xbf16>
    %c0_15 = arith.constant 0 : index
    %c0_16 = arith.constant 0 : index
    %29 = vector.load %arg4[%c0_15, %c0_16] : memref<128x384xbf16, #tpu.memory_space<vmem>>, vector<128x384xbf16>
    %cst_17 = arith.constant dense<0.000000e+00> : vector<40x384xf32>
    %30 = tpu.matmul %28, %29, %cst_17 {dimension_numbers = #tpu.dot_dimension_numbers<[1], [0], [0], [1], [0, 0, 1, 1], [], []>} : vector<40x128xbf16>, vector<128x384xbf16>, vector<40x384xf32> -> vector<40x384xf32>
    %31 = vector.extract_strided_slice %30 {offsets = [0, 0], sizes = [40, 128], strides = [1, 1]} : vector<40x384xf32> to vector<40x128xf32>
    %c1_i32_18 = arith.constant 1 : i32
    %32 = tpu.dynamic_rotate %31 by %c1_i32_18 dim 0 : vector<40x128xf32>, i32 -> vector<40x128xf32>
    %33 = vector.extract_strided_slice %30 {offsets = [0, 128], sizes = [40, 128], strides = [1, 1]} : vector<40x384xf32> to vector<40x128xf32>
    %34 = arith.addf %32, %33 : vector<40x128xf32>
    %35 = vector.extract_strided_slice %30 {offsets = [0, 256], sizes = [40, 128], strides = [1, 1]} : vector<40x384xf32> to vector<40x128xf32>
    %c39_i32_19 = arith.constant 39 : i32
    %36 = tpu.dynamic_rotate %35 by %c39_i32_19 dim 0 : vector<40x128xf32>, i32 -> vector<40x128xf32>
    %37 = arith.addf %34, %36 : vector<40x128xf32>
    %c0_20 = arith.constant 0 : index
    %c0_21 = arith.constant 0 : index
    %38 = vector.load %arg5[%c0_20, %c0_21] : memref<1x128xf32, #tpu.memory_space<vmem>>, vector<1x128xf32>
    %39 = vector.broadcast %38 : vector<1x128xf32> to vector<40x128xf32>
    %40 = arith.mulf %37, %39 : vector<40x128xf32>
    %c0_22 = arith.constant 0 : index
    %c0_23 = arith.constant 0 : index
    %41 = vector.load %arg6[%c0_22, %c0_23] : memref<1x128xf32, #tpu.memory_space<vmem>>, vector<1x128xf32>
    %42 = vector.broadcast %41 : vector<1x128xf32> to vector<40x128xf32>
    %43 = arith.addf %40, %42 : vector<40x128xf32>
    %cst_24 = arith.constant 0.000000e+00 : f32
    %44 = vector.broadcast %cst_24 : f32 to vector<40x128xf32>
    %45 = arith.maximumf %43, %44 : vector<40x128xf32>
    %46 = arith.mulf %45, %0 : vector<40x128xf32>
    %47 = arith.addf %7, %46 : vector<40x128xf32>
    %48 = arith.truncf %47 : vector<40x128xf32> to vector<40x128xbf16>
    %c0_25 = arith.constant 0 : index
    %c0_26 = arith.constant 0 : index
    %49 = vector.load %arg4[%c0_25, %c0_26] : memref<128x384xbf16, #tpu.memory_space<vmem>>, vector<128x384xbf16>
    %cst_27 = arith.constant dense<0.000000e+00> : vector<40x384xf32>
    %50 = tpu.matmul %48, %49, %cst_27 {dimension_numbers = #tpu.dot_dimension_numbers<[1], [0], [0], [1], [0, 0, 1, 1], [], []>} : vector<40x128xbf16>, vector<128x384xbf16>, vector<40x384xf32> -> vector<40x384xf32>
    %51 = vector.extract_strided_slice %50 {offsets = [0, 0], sizes = [40, 128], strides = [1, 1]} : vector<40x384xf32> to vector<40x128xf32>
    %c1_i32_28 = arith.constant 1 : i32
    %52 = tpu.dynamic_rotate %51 by %c1_i32_28 dim 0 : vector<40x128xf32>, i32 -> vector<40x128xf32>
    %53 = vector.extract_strided_slice %50 {offsets = [0, 128], sizes = [40, 128], strides = [1, 1]} : vector<40x384xf32> to vector<40x128xf32>
    %54 = arith.addf %52, %53 : vector<40x128xf32>
    %55 = vector.extract_strided_slice %50 {offsets = [0, 256], sizes = [40, 128], strides = [1, 1]} : vector<40x384xf32> to vector<40x128xf32>
    %c39_i32_29 = arith.constant 39 : i32
    %56 = tpu.dynamic_rotate %55 by %c39_i32_29 dim 0 : vector<40x128xf32>, i32 -> vector<40x128xf32>
    %57 = arith.addf %54, %56 : vector<40x128xf32>
    %c0_30 = arith.constant 0 : index
    %c0_31 = arith.constant 0 : index
    %58 = vector.load %arg5[%c0_30, %c0_31] : memref<1x128xf32, #tpu.memory_space<vmem>>, vector<1x128xf32>
    %59 = vector.broadcast %58 : vector<1x128xf32> to vector<40x128xf32>
    %60 = arith.mulf %57, %59 : vector<40x128xf32>
    %c0_32 = arith.constant 0 : index
    %c0_33 = arith.constant 0 : index
    %61 = vector.load %arg6[%c0_32, %c0_33] : memref<1x128xf32, #tpu.memory_space<vmem>>, vector<1x128xf32>
    %62 = vector.broadcast %61 : vector<1x128xf32> to vector<40x128xf32>
    %63 = arith.addf %60, %62 : vector<40x128xf32>
    %cst_34 = arith.constant 0.000000e+00 : f32
    %64 = vector.broadcast %cst_34 : f32 to vector<40x128xf32>
    %65 = arith.maximumf %63, %64 : vector<40x128xf32>
    %66 = arith.mulf %65, %0 : vector<40x128xf32>
    %67 = arith.truncf %66 : vector<40x128xf32> to vector<40x128xbf16>
    %c0_35 = arith.constant 0 : index
    %c0_36 = arith.constant 0 : index
    %68 = vector.load %arg7[%c0_35, %c0_36] : memref<128x384xbf16, #tpu.memory_space<vmem>>, vector<128x384xbf16>
    %cst_37 = arith.constant dense<0.000000e+00> : vector<40x384xf32>
    %69 = tpu.matmul %67, %68, %cst_37 {dimension_numbers = #tpu.dot_dimension_numbers<[1], [0], [0], [1], [0, 0, 1, 1], [], []>} : vector<40x128xbf16>, vector<128x384xbf16>, vector<40x384xf32> -> vector<40x384xf32>
    %70 = vector.extract_strided_slice %69 {offsets = [0, 0], sizes = [40, 128], strides = [1, 1]} : vector<40x384xf32> to vector<40x128xf32>
    %c1_i32_38 = arith.constant 1 : i32
    %71 = tpu.dynamic_rotate %70 by %c1_i32_38 dim 0 : vector<40x128xf32>, i32 -> vector<40x128xf32>
    %72 = vector.extract_strided_slice %69 {offsets = [0, 128], sizes = [40, 128], strides = [1, 1]} : vector<40x384xf32> to vector<40x128xf32>
    %73 = arith.addf %71, %72 : vector<40x128xf32>
    %74 = vector.extract_strided_slice %69 {offsets = [0, 256], sizes = [40, 128], strides = [1, 1]} : vector<40x384xf32> to vector<40x128xf32>
    %c39_i32_39 = arith.constant 39 : i32
    %75 = tpu.dynamic_rotate %74 by %c39_i32_39 dim 0 : vector<40x128xf32>, i32 -> vector<40x128xf32>
    %76 = arith.addf %73, %75 : vector<40x128xf32>
    %c0_40 = arith.constant 0 : index
    %c0_41 = arith.constant 0 : index
    %77 = vector.load %arg8[%c0_40, %c0_41] : memref<1x128xf32, #tpu.memory_space<vmem>>, vector<1x128xf32>
    %78 = vector.broadcast %77 : vector<1x128xf32> to vector<40x128xf32>
    %79 = arith.mulf %76, %78 : vector<40x128xf32>
    %c0_42 = arith.constant 0 : index
    %c0_43 = arith.constant 0 : index
    %80 = vector.load %arg9[%c0_42, %c0_43] : memref<1x128xf32, #tpu.memory_space<vmem>>, vector<1x128xf32>
    %81 = vector.broadcast %80 : vector<1x128xf32> to vector<40x128xf32>
    %82 = arith.addf %79, %81 : vector<40x128xf32>
    %cst_44 = arith.constant 0.000000e+00 : f32
    %83 = vector.broadcast %cst_44 : f32 to vector<40x128xf32>
    %84 = arith.maximumf %82, %83 : vector<40x128xf32>
    %85 = arith.mulf %84, %0 : vector<40x128xf32>
    %86 = arith.addf %66, %85 : vector<40x128xf32>
    %87 = arith.truncf %86 : vector<40x128xf32> to vector<40x128xbf16>
    %c0_45 = arith.constant 0 : index
    %c0_46 = arith.constant 0 : index
    %88 = vector.load %arg7[%c0_45, %c0_46] : memref<128x384xbf16, #tpu.memory_space<vmem>>, vector<128x384xbf16>
    %cst_47 = arith.constant dense<0.000000e+00> : vector<40x384xf32>
    %89 = tpu.matmul %87, %88, %cst_47 {dimension_numbers = #tpu.dot_dimension_numbers<[1], [0], [0], [1], [0, 0, 1, 1], [], []>} : vector<40x128xbf16>, vector<128x384xbf16>, vector<40x384xf32> -> vector<40x384xf32>
    %90 = vector.extract_strided_slice %89 {offsets = [0, 0], sizes = [40, 128], strides = [1, 1]} : vector<40x384xf32> to vector<40x128xf32>
    %c1_i32_48 = arith.constant 1 : i32
    %91 = tpu.dynamic_rotate %90 by %c1_i32_48 dim 0 : vector<40x128xf32>, i32 -> vector<40x128xf32>
    %92 = vector.extract_strided_slice %89 {offsets = [0, 128], sizes = [40, 128], strides = [1, 1]} : vector<40x384xf32> to vector<40x128xf32>
    %93 = arith.addf %91, %92 : vector<40x128xf32>
    %94 = vector.extract_strided_slice %89 {offsets = [0, 256], sizes = [40, 128], strides = [1, 1]} : vector<40x384xf32> to vector<40x128xf32>
    %c39_i32_49 = arith.constant 39 : i32
    %95 = tpu.dynamic_rotate %94 by %c39_i32_49 dim 0 : vector<40x128xf32>, i32 -> vector<40x128xf32>
    %96 = arith.addf %93, %95 : vector<40x128xf32>
    %c0_50 = arith.constant 0 : index
    %c0_51 = arith.constant 0 : index
    %97 = vector.load %arg8[%c0_50, %c0_51] : memref<1x128xf32, #tpu.memory_space<vmem>>, vector<1x128xf32>
    %98 = vector.broadcast %97 : vector<1x128xf32> to vector<40x128xf32>
    %99 = arith.mulf %96, %98 : vector<40x128xf32>
    %c0_52 = arith.constant 0 : index
    %c0_53 = arith.constant 0 : index
    %100 = vector.load %arg9[%c0_52, %c0_53] : memref<1x128xf32, #tpu.memory_space<vmem>>, vector<1x128xf32>
    %101 = vector.broadcast %100 : vector<1x128xf32> to vector<40x128xf32>
    %102 = arith.addf %99, %101 : vector<40x128xf32>
    %cst_54 = arith.constant 0.000000e+00 : f32
    %103 = vector.broadcast %cst_54 : f32 to vector<40x128xf32>
    %104 = arith.maximumf %102, %103 : vector<40x128xf32>
    %105 = arith.mulf %104, %0 : vector<40x128xf32>
    %106 = arith.addf %66, %105 : vector<40x128xf32>
    %107 = arith.truncf %106 : vector<40x128xf32> to vector<40x128xbf16>
    %c0_55 = arith.constant 0 : index
    %c0_56 = arith.constant 0 : index
    %108 = vector.load %arg7[%c0_55, %c0_56] : memref<128x384xbf16, #tpu.memory_space<vmem>>, vector<128x384xbf16>
    %cst_57 = arith.constant dense<0.000000e+00> : vector<40x384xf32>
    %109 = tpu.matmul %107, %108, %cst_57 {dimension_numbers = #tpu.dot_dimension_numbers<[1], [0], [0], [1], [0, 0, 1, 1], [], []>} : vector<40x128xbf16>, vector<128x384xbf16>, vector<40x384xf32> -> vector<40x384xf32>
    %110 = vector.extract_strided_slice %109 {offsets = [0, 0], sizes = [40, 128], strides = [1, 1]} : vector<40x384xf32> to vector<40x128xf32>
    %c1_i32_58 = arith.constant 1 : i32
    %111 = tpu.dynamic_rotate %110 by %c1_i32_58 dim 0 : vector<40x128xf32>, i32 -> vector<40x128xf32>
    %112 = vector.extract_strided_slice %109 {offsets = [0, 128], sizes = [40, 128], strides = [1, 1]} : vector<40x384xf32> to vector<40x128xf32>
    %113 = arith.addf %111, %112 : vector<40x128xf32>
    %114 = vector.extract_strided_slice %109 {offsets = [0, 256], sizes = [40, 128], strides = [1, 1]} : vector<40x384xf32> to vector<40x128xf32>
    %c39_i32_59 = arith.constant 39 : i32
    %115 = tpu.dynamic_rotate %114 by %c39_i32_59 dim 0 : vector<40x128xf32>, i32 -> vector<40x128xf32>
    %116 = arith.addf %113, %115 : vector<40x128xf32>
    %c0_60 = arith.constant 0 : index
    %c0_61 = arith.constant 0 : index
    %117 = vector.load %arg8[%c0_60, %c0_61] : memref<1x128xf32, #tpu.memory_space<vmem>>, vector<1x128xf32>
    %118 = vector.broadcast %117 : vector<1x128xf32> to vector<40x128xf32>
    %119 = arith.mulf %116, %118 : vector<40x128xf32>
    %c0_62 = arith.constant 0 : index
    %c0_63 = arith.constant 0 : index
    %120 = vector.load %arg9[%c0_62, %c0_63] : memref<1x128xf32, #tpu.memory_space<vmem>>, vector<1x128xf32>
    %121 = vector.broadcast %120 : vector<1x128xf32> to vector<40x128xf32>
    %122 = arith.addf %119, %121 : vector<40x128xf32>
    %cst_64 = arith.constant 0.000000e+00 : f32
    %123 = vector.broadcast %cst_64 : f32 to vector<40x128xf32>
    %124 = arith.maximumf %122, %123 : vector<40x128xf32>
    %125 = arith.mulf %124, %0 : vector<40x128xf32>
    %126 = arith.addf %7, %125 : vector<40x128xf32>
    %c0_65 = arith.constant 0 : index
    %c0_66 = arith.constant 0 : index
    %127 = vector.load %arg10[%c0_65, %c0_66] : memref<40x128xf32, #tpu.memory_space<vmem>>, vector<40x128xf32>
    tpu.vector_store %arg10[%c0_65, %c0_66], %126 {strides = array<i32>} : memref<40x128xf32, #tpu.memory_space<vmem>>, vector<40x128xf32>,
    return
  }
}

</mosaic_0001>

<llo_original>
// kernel: tpu_custom_call.1
$region0: #{tpu_custom_call.1}
  #allocation0 [shape = 'u32[]', space=smem, size = 0x4, offset = 0x4, fixed_abs, tag = 'smem constant byte address 0x4 - core index']
  #allocation1 [shape = 'u32[144,128]{1,0:T(1,128)}', space=vmem, size = 0x12000, scoped, tag = 'internal scratch']
  %s0 = inlined_call_operand.hbm [shape: bf16[40,64], index: 0, kind: input, shape index: {}]
  %s1 = inlined_call_operand.hbm [shape: f32[40,128], index: 1, kind: input, shape index: {}]
  %s2 = inlined_call_operand.hbm [shape: bf16[64,128], index: 2, kind: input, shape index: {}]
  %s3 = inlined_call_operand.vmem [shape: f32[1,128], index: 3, kind: input, shape index: {}]
  %s4 = inlined_call_operand.hbm [shape: bf16[128,384], index: 4, kind: input, shape index: {}]
  %s5 = inlined_call_operand.vmem [shape: f32[1,128], index: 5, kind: input, shape index: {}]
  %s6 = inlined_call_operand.vmem [shape: f32[1,128], index: 6, kind: input, shape index: {}]
  %s7 = inlined_call_operand.hbm [shape: bf16[128,384], index: 7, kind: input, shape index: {}]
  %s8 = inlined_call_operand.vmem [shape: f32[1,128], index: 8, kind: input, shape index: {}]
  %s9 = inlined_call_operand.vmem [shape: f32[1,128], index: 9, kind: input, shape index: {}]
  %s10 = inlined_call_operand.hbm [shape: f32[40,128], index: 10, kind: output, shape index: {}]
  %s11 = sld [smem:[#allocation0]]
  $region70: #{tpu_custom_call.1} parent=0
    _
  %s13 = ssub.s32 1, %s11
  %s14 = scalar_select 0, %s13, %s11
  $region1: #{tpu_custom_call.1} parent=0
    #allocation2 [shape = 'u8[10240]{0}', space=vmem, size = 0x2800, scoped, tag = 'input window, operand 0, single buffered']
    #allocation3 [shape = 's32[1]{0}', space=sflag, size = 0x4, scoped, tag = 'scoped memory for tpu_custom_call.1']
    #allocation4 [shape = 's32[1]{0}', space=sflag, size = 0x4, scoped, tag = 'scoped memory for tpu_custom_call.1']
    #allocation5 [shape = 'u8[20480]{0}', space=vmem, size = 0x5000, scoped, tag = 'input window, operand 1, single buffered']
    #allocation6 [shape = 's32[1]{0}', space=sflag, size = 0x4, scoped, tag = 'scoped memory for tpu_custom_call.1']
    #allocation7 [shape = 'u8[16384]{0}', space=vmem, size = 0x4000, scoped, tag = 'input window, operand 2, single buffered']
    #allocation8 [shape = 'u8[98304]{0}', space=vmem, size = 0x18000, scoped, tag = 'input window, operand 4, single buffered']
    #allocation9 [shape = 's32[1]{0}', space=sflag, size = 0x4, scoped, tag = 'scoped memory for tpu_custom_call.1']
    #allocation10 [shape = 'u8[98304]{0}', space=vmem, size = 0x18000, scoped, tag = 'input window, operand 7, single buffered']
    #allocation11 [shape = 'u8[20480]{0}', space=vmem, size = 0x5000, scoped, tag = 'output window, operand 0, single buffered']
    %15 = vsyncpa [#allocation3], 0
    %16 = vsyncpa [#allocation6], 0
    %17 = vsyncpa [#allocation9], 0
    %18 = vsyncpa [#allocation4], 0
    // Predicated region
    $region2: #{tpu_custom_call.1} parent=1 // pred_check
      _
    $region3: #{tpu_custom_call.1} parent=1 // pred_check_branch
      %20 = sbr.rel (0) target = $region5
    $region4: #{tpu_custom_call.1} parent=1 // pred_region
      %s22 = ssub.s32 320, 320
      %23 = vsyncadd [#allocation3], %s22
      %s24 = sshll.u32 [#allocation2], 4
      %s25 = int_to_ptr.vmem [resolvable:$true] %s24
      %30 = dma.hbm_to_vmem [thread:$0]  %s0, 320, %s25, [#allocation3], 64, 64, 4
    $region5: #{tpu_custom_call.1} parent=1 // pred_fallthru
      _
    // Predicated region
    $region6: #{tpu_custom_call.1} parent=1 // pred_check
      _
    $region7: #{tpu_custom_call.1} parent=1 // pred_check_branch
      %32 = sbr.rel (0) target = $region9
    $region8: #{tpu_custom_call.1} parent=1 // pred_region
      %s34 = ssub.s32 640, 640
      %35 = vsyncadd [#allocation6], %s34
      %s36 = sshll.u32 [#allocation5], 4
      %s37 = int_to_ptr.vmem [resolvable:$true] %s36
      %42 = dma.hbm_to_vmem [thread:$0]  %s1, 640, %s37, [#allocation6], 128, 128, 8
    $region9: #{tpu_custom_call.1} parent=1 // pred_fallthru
      _
    // Predicated region
    $region10: #{tpu_custom_call.1} parent=1 // pred_check
      _
    $region11: #{tpu_custom_call.1} parent=1 // pred_check_branch
      %44 = sbr.rel (0) target = $region13
    $region12: #{tpu_custom_call.1} parent=1 // pred_region
      %s46 = ssub.s32 512, 512
      %47 = vsyncadd [#allocation6], %s46
      %s48 = sshll.u32 [#allocation7], 4
      %s49 = int_to_ptr.vmem [resolvable:$true] %s48
      %54 = dma.hbm_to_vmem [thread:$0]  %s2, 512, %s49, [#allocation6], 64, 64, 4
    $region13: #{tpu_custom_call.1} parent=1 // pred_fallthru
      _
    // Predicated region
    $region14: #{tpu_custom_call.1} parent=1 // pred_check
      _
    $region15: #{tpu_custom_call.1} parent=1 // pred_check_branch
      %56 = sbr.rel (0) target = $region17
    $region16: #{tpu_custom_call.1} parent=1 // pred_region
      _
    $region17: #{tpu_custom_call.1} parent=1 // pred_fallthru
      _
    // Predicated region
    $region18: #{tpu_custom_call.1} parent=1 // pred_check
      _
    $region19: #{tpu_custom_call.1} parent=1 // pred_check_branch
      %58 = sbr.rel (0) target = $region21
    $region20: #{tpu_custom_call.1} parent=1 // pred_region
      %s60 = ssub.s32 3072, 3072
      %61 = vsyncadd [#allocation9], %s60
      %s62 = sshll.u32 [#allocation8], 4
      %s63 = int_to_ptr.vmem [resolvable:$true] %s62
      %68 = dma.hbm_to_vmem [thread:$0]  %s4, 3072, %s63, [#allocation9], 192, 192, 12
    $region21: #{tpu_custom_call.1} parent=1 // pred_fallthru
      _
    // Predicated region
    $region22: #{tpu_custom_call.1} parent=1 // pred_check
      _
    $region23: #{tpu_custom_call.1} parent=1 // pred_check_branch
      %70 = sbr.rel (0) target = $region25
    $region24: #{tpu_custom_call.1} parent=1 // pred_region
      _
    $region25: #{tpu_custom_call.1} parent=1 // pred_fallthru
      _
    // Predicated region
    $region26: #{tpu_custom_call.1} parent=1 // pred_check
      _
    $region27: #{tpu_custom_call.1} parent=1 // pred_check_branch
      %72 = sbr.rel (0) target = $region29
    $region28: #{tpu_custom_call.1} parent=1 // pred_region
      _
    $region29: #{tpu_custom_call.1} parent=1 // pred_fallthru
      _
    // Predicated region
    $region30: #{tpu_custom_call.1} parent=1 // pred_check
      _
    $region31: #{tpu_custom_call.1} parent=1 // pred_check_branch
      %74 = sbr.rel (0) target = $region33
    $region32: #{tpu_custom_call.1} parent=1 // pred_region
      %s76 = ssub.s32 3072, 3072
      %77 = vsyncadd [#allocation9], %s76
      %s78 = sshll.u32 [#allocation10], 4
      %s79 = int_to_ptr.vmem [resolvable:$true] %s78
      %84 = dma.hbm_to_vmem [thread:$0]  %s7, 3072, %s79, [#allocation9], 192, 192, 12
    $region33: #{tpu_custom_call.1} parent=1 // pred_fallthru
      _
    // Predicated region
    $region34: #{tpu_custom_call.1} parent=1 // pred_check
      _
    $region35: #{tpu_custom_call.1} parent=1 // pred_check_branch
      %86 = sbr.rel (0) target = $region37
    $region36: #{tpu_custom_call.1} parent=1 // pred_region
      _
    $region37: #{tpu_custom_call.1} parent=1 // pred_fallthru
      _
    // Predicated region
    $region38: #{tpu_custom_call.1} parent=1 // pred_check
      _
    $region39: #{tpu_custom_call.1} parent=1 // pred_check_branch
      %88 = sbr.rel (0) target = $region41
    $region40: #{tpu_custom_call.1} parent=1 // pred_region
      _
    $region41: #{tpu_custom_call.1} parent=1 // pred_fallthru
      _
    // Predicated region
    $region42: #{tpu_custom_call.1} parent=1 // pred_check
      _
    $region43: #{tpu_custom_call.1} parent=1 // pred_check_branch
      %90 = sbr.rel (0) target = $region45
    $region44: #{tpu_custom_call.1} parent=1 // pred_region
      %91 = dma.done [#allocation3], 320
    $region45: #{tpu_custom_call.1} parent=1 // pred_fallthru
      _
    // Predicated region
    $region46: #{tpu_custom_call.1} parent=1 // pred_check
      _
    $region47: #{tpu_custom_call.1} parent=1 // pred_check_branch
      %93 = sbr.rel (0) target = $region49
    $region48: #{tpu_custom_call.1} parent=1 // pred_region
      %94 = dma.done [#allocation6], 640
    $region49: #{tpu_custom_call.1} parent=1 // pred_fallthru
      _
    // Predicated region
    $region50: #{tpu_custom_call.1} parent=1 // pred_check
      _
    $region51: #{tpu_custom_call.1} parent=1 // pred_check_branch
      %96 = sbr.rel (0) target = $region53
    $region52: #{tpu_custom_call.1} parent=1 // pred_region
      %97 = dma.done [#allocation6], 512
    $region53: #{tpu_custom_call.1} parent=1 // pred_fallthru
      _
    // Predicated region
    $region54: #{tpu_custom_call.1} parent=1 // pred_check
      _
    $region55: #{tpu_custom_call.1} parent=1 // pred_check_branch
      %99 = sbr.rel (0) target = $region57
    $region56: #{tpu_custom_call.1} parent=1 // pred_region
      %100 = dma.done [#allocation9], 3072
    $region57: #{tpu_custom_call.1} parent=1 // pred_fallthru
      _
    // Predicated region
    $region58: #{tpu_custom_call.1} parent=1 // pred_check
      _
    $region59: #{tpu_custom_call.1} parent=1 // pred_check_branch
      %102 = sbr.rel (0) target = $region61
    $region60: #{tpu_custom_call.1} parent=1 // pred_region
      %103 = dma.done [#allocation9], 3072
    $region61: #{tpu_custom_call.1} parent=1 // pred_fallthru
      _
    %v105 = vld [vmem:[#allocation5] sm:$0xff]
    %v106 = vld [vmem:[#allocation5 + $0x8] sm:$0xff]
    %v107 = vld [vmem:[#allocation5 + $0x10] sm:$0xff]
    %v108 = vld [vmem:[#allocation5 + $0x18] sm:$0xff]
    %v109 = vld [vmem:[#allocation5 + $0x20] sm:$0xff]
    %v110 = vld [vmem:[#allocation2] sm:$0xf]
    %v111 = vld [vmem:[#allocation2 + $0x4] sm:$0xf]
    %v112 = vld [vmem:[#allocation2 + $0x8] sm:$0xf]
    %v113 = vld [vmem:[#allocation2 + $0xc] sm:$0xf]
    %v114 = vld [vmem:[#allocation2 + $0x10] sm:$0xf]
    %v115 = vld [vmem:[#allocation7] sm:$0xf]
    %v116 = vld [vmem:[#allocation7 + $0x4] sm:$0xf]
    %v117 = vld [vmem:[#allocation7 + $0x8] sm:$0xf]
    %v118 = vld [vmem:[#allocation7 + $0xc] sm:$0xf]
    %v119 = vld [vmem:[#allocation7 + $0x10] sm:$0xf]
    %v120 = vld [vmem:[#allocation7 + $0x14] sm:$0xf]
    %v121 = vld [vmem:[#allocation7 + $0x18] sm:$0xf]
    %v122 = vld [vmem:[#allocation7 + $0x1c] sm:$0xf]
    %v123 = vld [vmem:[%s3] sm:$0x1]
    %v125 = vlaneseq
    %v126 = vshrl.u32 %v125, 7
    %v127 = vsub.s32 0, %v126
    %v128 = vrot.slane %v123, %v127
    %v135 = vunpack.c.l.b16 %v110
    %v136 = vunpack.c.l.b16 %v111
    %v137 = vunpack.c.l.b16 %v112
    %v138 = vunpack.c.l.b16 %v113
    %v139 = vunpack.c.l.b16 %v114
    %v140 = vpack.c.b16 %v136, %v135
    %v141 = vpack.c.b16 %v138, %v137
    %v142 = vpack.c.b16 %v139, %v139
    %v151 = vunpack.c.l.b16 %v115
    %v152 = vunpack.c.l.b16 %v116
    %v153 = vunpack.c.l.b16 %v117
    %v154 = vunpack.c.l.b16 %v118
    %v155 = vunpack.c.l.b16 %v119
    %v156 = vunpack.c.l.b16 %v120
    %v157 = vunpack.c.l.b16 %v121
    %v158 = vunpack.c.l.b16 %v122
    %v159 = vpack.c.b16 %v152, %v151
    %v160 = vpack.c.b16 %v154, %v153
    %v161 = vpack.c.b16 %v156, %v155
    %v162 = vpack.c.b16 %v158, %v157
    %vm167 = vcmask 523264
    %v169 = vsel %vm167, %v140, 0
    %v172 = vsel %vm167, %v141, 0
    %v175 = vsel %vm167, %v142, 0
    %177 = vmatprep.subr.bf16.mxu0 0
    %178 = vmatpush1.bf16.msra.mxu0 %v159
    %179 = vmatprep.subr.bf16.mxu0 0
    %180 = vmatpush1.bf16.msra.mxu0 %v160
    %181 = vmatprep.subr.bf16.mxu0 0
    %182 = vmatpush1.bf16.msra.mxu0 %v161
    %183 = vmatprep.subr.bf16.mxu0 0
    %184 = vmatpush1.bf16.msra.mxu0 %v162
    %185 = vmatprep.subr.bf16.mxu0 0
    %186 = vmatpush1.bf16.msra.mxu0 0
    %187 = vmatprep.subr.bf16.mxu0 0
    %188 = vmatpush1.bf16.msra.mxu0 0
    %189 = vmatprep.subr.bf16.mxu0 0
    %190 = vmatpush1.bf16.msra.mxu0 0
    %191 = vmatprep.subr.bf16.mxu0 0
    %192 = vmatpush1.bf16.msra.mxu0 0
    %193 = vmatprep.subr.bf16.mxu0 0
    %194 = vmatpush1.bf16.msra.mxu0 0
    %195 = vmatprep.subr.bf16.mxu0 0
    %196 = vmatpush1.bf16.msra.mxu0 0
    %197 = vmatprep.subr.bf16.mxu0 0
    %198 = vmatpush1.bf16.msra.mxu0 0
    %199 = vmatprep.subr.bf16.mxu0 0
    %200 = vmatpush1.bf16.msra.mxu0 0
    %201 = vmatprep.subr.bf16.mxu0 0
    %202 = vmatpush1.bf16.msra.mxu0 0
    %203 = vmatprep.subr.bf16.mxu0 0
    %204 = vmatpush1.bf16.msra.mxu0 0
    %205 = vmatprep.subr.bf16.mxu0 0
    %206 = vmatpush1.bf16.msra.mxu0 0
    %207 = vmatprep.subr.bf16.mxu0 0
    %208 = vmatpush1.bf16.msra.mxu0 0
    %209 = vmatprep.mubr.bf16.mxu0 0
    %210 = vmatmul.mubr.bf16.gmra.mrb[0].mxu0 %v169
    %v211 = vpop.f32.mrb[0].mxu0
    %v212 = vadd.f32 %v128, %v211
    %v213 = vpop.f32.mrb[0].mxu0
    %v214 = vpop.f32.mrb[0].mxu0
    %v215 = vadd.f32 %v128, %v214
    %v216 = vpop.f32.mrb[0].mxu0
    %217 = vmatprep.mubr.bf16.mxu0 0
    %218 = vmatmul.mubr.bf16.gmra.mrb[0].mxu0 %v172
    %v219 = vpop.f32.mrb[0].mxu0
    %v220 = vadd.f32 %v128, %v219
    %v221 = vpop.f32.mrb[0].mxu0
    %v222 = vpop.f32.mrb[0].mxu0
    %v223 = vadd.f32 %v128, %v222
    %v224 = vpop.f32.mrb[0].mxu0
    %225 = vmatprep.mubr.bf16.mxu0 0
    %226 = vmatmul.mubr.bf16.gmra.mrb[0].mxu0 %v175
    %v227 = vpop.f32.mrb[0].mxu0
    %v228 = vadd.f32 %v128, %v227
    %v229 = vpop.f32.mrb[0].mxu0
    %v230 = vpop.f32.mrb[0].mxu0
    %v231 = vpop.f32.mrb[0].mxu0
    %232 = vdwg.mxu0
    %v233 = vmul.f32 %v212, %v105
    %v234 = vmul.f32 %v215, %v106
    %v235 = vmul.f32 %v220, %v107
    %v236 = vmul.f32 %v223, %v108
    %v237 = vmul.f32 %v228, %v109
    %v238 = vpack.c.bf16 %v234, %v233
    %v239 = vpack.c.bf16 %v236, %v235
    %v240 = vpack.c.bf16 %v237, %v237
    %v241 = vld [vmem:[#allocation8] sm:$0xff]
    %v242 = vld [vmem:[#allocation8 + $0x8] sm:$0xf]
    %v243 = vld [vmem:[#allocation8 + $0xc] sm:$0xff]
    %v244 = vld [vmem:[#allocation8 + $0x14] sm:$0xf]
    %v245 = vld [vmem:[#allocation8 + $0x18] sm:$0xff]
    %v246 = vld [vmem:[#allocation8 + $0x20] sm:$0xf]
    %v247 = vld [vmem:[#allocation8 + $0x24] sm:$0xff]
    %v248 = vld [vmem:[#allocation8 + $0x2c] sm:$0xf]
    %v249 = vld [vmem:[#allocation8 + $0x30] sm:$0xff]
    %v250 = vld [vmem:[#allocation8 + $0x38] sm:$0xf]
    %v251 = vld [vmem:[#allocation8 + $0x3c] sm:$0xff]
    %v252 = vld [vmem:[#allocation8 + $0x44] sm:$0xf]
    %v253 = vld [vmem:[#allocation8 + $0x48] sm:$0xff]
    %v254 = vld [vmem:[#allocation8 + $0x50] sm:$0xf]
    %v255 = vld [vmem:[#allocation8 + $0x54] sm:$0xff]
    %v256 = vld [vmem:[#allocation8 + $0x5c] sm:$0xf]
    %v257 = vld [vmem:[#allocation8 + $0x60] sm:$0xff]
    %v258 = vld [vmem:[#allocation8 + $0x68] sm:$0xf]
    %v259 = vld [vmem:[#allocation8 + $0x6c] sm:$0xff]
    %v260 = vld [vmem:[#allocation8 + $0x74] sm:$0xf]
    %v261 = vld [vmem:[#allocation8 + $0x78] sm:$0xff]
    %v262 = vld [vmem:[#allocation8 + $0x80] sm:$0xf]
    %v263 = vld [vmem:[#allocation8 + $0x84] sm:$0xff]
    %v264 = vld [vmem:[#allocation8 + $0x8c] sm:$0xf]
    %v265 = vld [vmem:[#allocation8 + $0x90] sm:$0xff]
    %v266 = vld [vmem:[#allocation8 + $0x98] sm:$0xf]
    %v267 = vld [vmem:[#allocation8 + $0x9c] sm:$0xff]
    %v268 = vld [vmem:[#allocation8 + $0xa4] sm:$0xf]
    %v269 = vld [vmem:[#allocation8 + $0xa8] sm:$0xff]
    %v270 = vld [vmem:[#allocation8 + $0xb0] sm:$0xf]
    %v271 = vld [vmem:[#allocation8 + $0xb4] sm:$0xff]
    %v272 = vld [vmem:[#allocation8 + $0xbc] sm:$0xf]
    %v305 = vunpack.c.l.b16 %v241
    %v306 = vunpack.c.h.b16 %v241
    %v307 = vunpack.c.l.b16 %v242
    %v308 = vunpack.c.l.b16 %v243
    %v309 = vunpack.c.h.b16 %v243
    %v310 = vunpack.c.l.b16 %v244
    %v311 = vunpack.c.l.b16 %v245
    %v312 = vunpack.c.h.b16 %v245
    %v313 = vunpack.c.l.b16 %v246
    %v314 = vunpack.c.l.b16 %v247
    %v315 = vunpack.c.h.b16 %v247
    %v316 = vunpack.c.l.b16 %v248
    %v317 = vunpack.c.l.b16 %v249
    %v318 = vunpack.c.h.b16 %v249
    %v319 = vunpack.c.l.b16 %v250
    %v320 = vunpack.c.l.b16 %v251
    %v321 = vunpack.c.h.b16 %v251
    %v322 = vunpack.c.l.b16 %v252
    %v323 = vunpack.c.l.b16 %v253
    %v324 = vunpack.c.h.b16 %v253
    %v325 = vunpack.c.l.b16 %v254
    %v326 = vunpack.c.l.b16 %v255
    %v327 = vunpack.c.h.b16 %v255
    %v328 = vunpack.c.l.b16 %v256
    %v329 = vunpack.c.l.b16 %v257
    %v330 = vunpack.c.h.b16 %v257
    %v331 = vunpack.c.l.b16 %v258
    %v332 = vunpack.c.l.b16 %v259
    %v333 = vunpack.c.h.b16 %v259
    %v334 = vunpack.c.l.b16 %v260
    %v335 = vunpack.c.l.b16 %v261
    %v336 = vunpack.c.h.b16 %v261
    %v337 = vunpack.c.l.b16 %v262
    %v338 = vunpack.c.l.b16 %v263
    %v339 = vunpack.c.h.b16 %v263
    %v340 = vunpack.c.l.b16 %v264
    %v341 = vunpack.c.l.b16 %v265
    %v342 = vunpack.c.h.b16 %v265
    %v343 = vunpack.c.l.b16 %v266
    %v344 = vunpack.c.l.b16 %v267
    %v345 = vunpack.c.h.b16 %v267
    %v346 = vunpack.c.l.b16 %v268
    %v347 = vunpack.c.l.b16 %v269
    %v348 = vunpack.c.h.b16 %v269
    %v349 = vunpack.c.l.b16 %v270
    %v350 = vunpack.c.l.b16 %v271
    %v351 = vunpack.c.h.b16 %v271
    %v352 = vunpack.c.l.b16 %v272
    %v353 = vpack.c.b16 %v308, %v305
    %v354 = vpack.c.b16 %v309, %v306
    %v355 = vpack.c.b16 %v310, %v307
    %v356 = vpack.c.b16 %v314, %v311
    %v357 = vpack.c.b16 %v315, %v312
    %v358 = vpack.c.b16 %v316, %v313
    %v359 = vpack.c.b16 %v320, %v317
    %v360 = vpack.c.b16 %v321, %v318
    %v361 = vpack.c.b16 %v322, %v319
    %v362 = vpack.c.b16 %v326, %v323
    %v363 = vpack.c.b16 %v327, %v324
    %v364 = vpack.c.b16 %v328, %v325
    %v365 = vpack.c.b16 %v332, %v329
    %v366 = vpack.c.b16 %v333, %v330
    %v367 = vpack.c.b16 %v334, %v331
    %v368 = vpack.c.b16 %v338, %v335
    %v369 = vpack.c.b16 %v339, %v336
    %v370 = vpack.c.b16 %v340, %v337
    %v371 = vpack.c.b16 %v344, %v341
    %v372 = vpack.c.b16 %v345, %v342
    %v373 = vpack.c.b16 %v346, %v343
    %v374 = vpack.c.b16 %v350, %v347
    %v375 = vpack.c.b16 %v351, %v348
    %v376 = vpack.c.b16 %v352, %v349
    %401 = vmatprep.subr.bf16.mxu0 %v354
    %402 = vmatpush1.bf16.msra.mxu0 %v353
    %403 = vmatprep.subr.bf16.mxu0 %v357
    %404 = vmatpush1.bf16.msra.mxu0 %v356
    %405 = vmatprep.subr.bf16.mxu0 %v360
    %406 = vmatpush1.bf16.msra.mxu0 %v359
    %407 = vmatprep.subr.bf16.mxu0 %v363
    %408 = vmatpush1.bf16.msra.mxu0 %v362
    %409 = vmatprep.subr.bf16.mxu0 %v366
    %410 = vmatpush1.bf16.msra.mxu0 %v365
    %411 = vmatprep.subr.bf16.mxu0 %v369
    %412 = vmatpush1.bf16.msra.mxu0 %v368
    %413 = vmatprep.subr.bf16.mxu0 %v372
    %414 = vmatpush1.bf16.msra.mxu0 %v371
    %415 = vmatprep.subr.bf16.mxu0 %v375
    %416 = vmatpush1.bf16.msra.mxu0 %v374
    %417 = vmatprep.subr.bf16.mxu0 0
    %418 = vmatpush1.bf16.msra.mxu0 0
    %419 = vmatprep.subr.bf16.mxu0 0
    %420 = vmatpush1.bf16.msra.mxu0 0
    %421 = vmatprep.subr.bf16.mxu0 0
    %422 = vmatpush1.bf16.msra.mxu0 0
    %423 = vmatprep.subr.bf16.mxu0 0
    %424 = vmatpush1.bf16.msra.mxu0 0
    %425 = vmatprep.subr.bf16.mxu0 0
    %426 = vmatpush1.bf16.msra.mxu0 0
    %427 = vmatprep.subr.bf16.mxu0 0
    %428 = vmatpush1.bf16.msra.mxu0 0
    %429 = vmatprep.subr.bf16.mxu0 0
    %430 = vmatpush1.bf16.msra.mxu0 0
    %431 = vmatprep.subr.bf16.mxu0 0
    %432 = vmatpush1.bf16.msra.mxu0 0
    %433 = vmatprep.mubr.bf16.mxu0 0
    %434 = vmatmul.mubr.bf16.gmra.mrb[0].mxu0 %v238
    %v435 = vpop.f32.mrb[0].mxu0
    %v436 = vadd.f32 0.0, %v435
    %v437 = vpop.f32.mrb[0].mxu0
    %v438 = vadd.f32 0.0, %v437
    %v439 = vpop.f32.mrb[0].mxu0
    %v440 = vadd.f32 0.0, %v439
    %v441 = vpop.f32.mrb[0].mxu0
    %v442 = vadd.f32 0.0, %v441
    %443 = vmatprep.mubr.bf16.mxu0 0
    %444 = vmatmul.mubr.bf16.gmra.mrb[0].mxu0 %v239
    %v445 = vpop.f32.mrb[0].mxu0
    %v446 = vadd.f32 0.0, %v445
    %v447 = vpop.f32.mrb[0].mxu0
    %v448 = vadd.f32 0.0, %v447
    %v449 = vpop.f32.mrb[0].mxu0
    %v450 = vadd.f32 0.0, %v449
    %v451 = vpop.f32.mrb[0].mxu0
    %v452 = vadd.f32 0.0, %v451
    %453 = vmatprep.mubr.bf16.mxu0 0
    %454 = vmatmul.mubr.bf16.gmra.mrb[0].mxu0 %v240
    %v455 = vpop.f32.mrb[0].mxu0
    %v456 = vadd.f32 0.0, %v455
    %v457 = vpop.f32.mrb[0].mxu0
    %v458 = vadd.f32 0.0, %v457
    %v459 = vpop.f32.mrb[0].mxu0
    %v460 = vpop.f32.mrb[0].mxu0
    %461 = vdwg.mxu0
    %462 = vmatprep.subr.bf16.mxu0 0
    %463 = vmatpush1.bf16.msra.mxu0 %v355
    %464 = vmatprep.subr.bf16.mxu0 0
    %465 = vmatpush1.bf16.msra.mxu0 %v358
    %466 = vmatprep.subr.bf16.mxu0 0
    %467 = vmatpush1.bf16.msra.mxu0 %v361
    %468 = vmatprep.subr.bf16.mxu0 0
    %469 = vmatpush1.bf16.msra.mxu0 %v364
    %470 = vmatprep.subr.bf16.mxu0 0
    %471 = vmatpush1.bf16.msra.mxu0 %v367
    %472 = vmatprep.subr.bf16.mxu0 0
    %473 = vmatpush1.bf16.msra.mxu0 %v370
    %474 = vmatprep.subr.bf16.mxu0 0
    %475 = vmatpush1.bf16.msra.mxu0 %v373
    %476 = vmatprep.subr.bf16.mxu0 0
    %477 = vmatpush1.bf16.msra.mxu0 %v376
    %478 = vmatprep.subr.bf16.mxu0 0
    %479 = vmatpush1.bf16.msra.mxu0 0
    %480 = vmatprep.subr.bf16.mxu0 0
    %481 = vmatpush1.bf16.msra.mxu0 0
    %482 = vmatprep.subr.bf16.mxu0 0
    %483 = vmatpush1.bf16.msra.mxu0 0
    %484 = vmatprep.subr.bf16.mxu0 0
    %485 = vmatpush1.bf16.msra.mxu0 0
    %486 = vmatprep.subr.bf16.mxu0 0
    %487 = vmatpush1.bf16.msra.mxu0 0
    %488 = vmatprep.subr.bf16.mxu0 0
    %489 = vmatpush1.bf16.msra.mxu0 0
    %490 = vmatprep.subr.bf16.mxu0 0
    %491 = vmatpush1.bf16.msra.mxu0 0
    %492 = vmatprep.subr.bf16.mxu0 0
    %493 = vmatpush1.bf16.msra.mxu0 0
    %494 = vmatprep.mubr.bf16.mxu0 0
    %495 = vmatmul.mubr.bf16.gmra.mrb[0].mxu0 %v238
    %v496 = vpop.f32.mrb[0].mxu0
    %v497 = vadd.f32 0.0, %v496
    %v498 = vpop.f32.mrb[0].mxu0
    %v499 = vpop.f32.mrb[0].mxu0
    %v500 = vadd.f32 0.0, %v499
    %v501 = vpop.f32.mrb[0].mxu0
    %502 = vmatprep.mubr.bf16.mxu0 0
    %503 = vmatmul.mubr.bf16.gmra.mrb[0].mxu0 %v239
    %v504 = vpop.f32.mrb[0].mxu0
    %v505 = vadd.f32 0.0, %v504
    %v506 = vpop.f32.mrb[0].mxu0
    %v507 = vpop.f32.mrb[0].mxu0
    %v508 = vadd.f32 0.0, %v507
    %v509 = vpop.f32.mrb[0].mxu0
    %510 = vmatprep.mubr.bf16.mxu0 0
    %511 = vmatmul.mubr.bf16.gmra.mrb[0].mxu0 %v240
    %v512 = vpop.f32.mrb[0].mxu0
    %v513 = vadd.f32 0.0, %v512
    %v514 = vpop.f32.mrb[0].mxu0
    %v515 = vpop.f32.mrb[0].mxu0
    %v516 = vpop.f32.mrb[0].mxu0
    %517 = vdwg.mxu0
    %v518 = vrot.slane %v436, 7
    %v519 = vrot.slane %v440, 7
    %v520 = vrot.slane %v446, 7
    %v521 = vrot.slane %v450, 7
    %v522 = vrot.slane %v456, 7
    %v523 = vlaneseq
    %v524 = vshrl.u32 %v523, 7
    %vm525 = vcmp.lt.s32.totalorder %v524, 1
    %v526 = vsel %vm525, %v521, %v522
    %v527 = vsel %vm525, %v520, %v521
    %v528 = vsel %vm525, %v519, %v520
    %v529 = vsel %vm525, %v518, %v519
    %v530 = vsel %vm525, %v522, %v518
    %v531 = vadd.f32 %v530, %v438
    %v532 = vadd.f32 %v529, %v442
    %v533 = vadd.f32 %v528, %v448
    %v534 = vadd.f32 %v527, %v452
    %v535 = vadd.f32 %v526, %v458
    %v536 = vrot.slane %v497, 1
    %v537 = vrot.slane %v500, 1
    %v538 = vrot.slane %v505, 1
    %v539 = vrot.slane %v508, 1
    %v540 = vrot.slane %v513, 1
    %vm541 = vcmp.lt.s32.totalorder %v524, 7
    %v542 = vsel %vm541, %v539, %v540
    %v543 = vsel %vm541, %v538, %v539
    %v544 = vsel %vm541, %v537, %v538
    %v545 = vsel %vm541, %v536, %v537
    %v546 = vsel %vm541, %v540, %v536
    %v547 = vadd.f32 %v531, %v545
    %v548 = vadd.f32 %v532, %v544
    %v549 = vadd.f32 %v533, %v543
    %v550 = vadd.f32 %v534, %v542
    %v551 = vadd.f32 %v535, %v546
    %v552 = vld [vmem:[%s5] sm:$0x1]
    %v554 = vlaneseq
    %v555 = vshrl.u32 %v554, 7
    %v556 = vsub.s32 0, %v555
    %v557 = vrot.slane %v552, %v556
    %v559 = vmul.f32 %v547, %v557
    %v560 = vmul.f32 %v548, %v557
    %v561 = vmul.f32 %v549, %v557
    %v562 = vmul.f32 %v550, %v557
    %v563 = vmul.f32 %v551, %v557
    %v564 = vld [vmem:[%s6] sm:$0x1]
    %v566 = vlaneseq
    %v567 = vshrl.u32 %v566, 7
    %v568 = vsub.s32 0, %v567
    %v569 = vrot.slane %v564, %v568
    %v571 = vadd.f32 %v559, %v569
    %v572 = vadd.f32 %v560, %v569
    %v573 = vadd.f32 %v561, %v569
    %v574 = vadd.f32 %v562, %v569
    %v575 = vadd.f32 %v563, %v569
    %v576 = vmax.f32 %v571, 0.0
    %v577 = vmax.f32 %v572, 0.0
    %v578 = vmax.f32 %v573, 0.0
    %v579 = vmax.f32 %v574, 0.0
    %v580 = vmax.f32 %v575, 0.0
    %v581 = vmul.f32 %v576, %v105
    %v582 = vmul.f32 %v577, %v106
    %v583 = vmul.f32 %v578, %v107
    %v584 = vmul.f32 %v579, %v108
    %v585 = vmul.f32 %v580, %v109
    %v586 = vadd.f32 %v233, %v581
    %v587 = vadd.f32 %v234, %v582
    %v588 = vadd.f32 %v235, %v583
    %v589 = vadd.f32 %v236, %v584
    %v590 = vadd.f32 %v237, %v585
    %v591 = vpack.c.bf16 %v587, %v586
    %v592 = vpack.c.bf16 %v589, %v588
    %v593 = vpack.c.bf16 %v590, %v590
    %594 = vmatprep.subr.bf16.mxu0 %v354
    %595 = vmatpush1.bf16.msra.mxu0 %v353
    %596 = vmatprep.subr.bf16.mxu0 %v357
    %597 = vmatpush1.bf16.msra.mxu0 %v356
    %598 = vmatprep.subr.bf16.mxu0 %v360
    %599 = vmatpush1.bf16.msra.mxu0 %v359
    %600 = vmatprep.subr.bf16.mxu0 %v363
    %601 = vmatpush1.bf16.msra.mxu0 %v362
    %602 = vmatprep.subr.bf16.mxu0 %v366
    %603 = vmatpush1.bf16.msra.mxu0 %v365
    %604 = vmatprep.subr.bf16.mxu0 %v369
    %605 = vmatpush1.bf16.msra.mxu0 %v368
    %606 = vmatprep.subr.bf16.mxu0 %v372
    %607 = vmatpush1.bf16.msra.mxu0 %v371
    %608 = vmatprep.subr.bf16.mxu0 %v375
    %609 = vmatpush1.bf16.msra.mxu0 %v374
    %610 = vmatprep.subr.bf16.mxu0 0
    %611 = vmatpush1.bf16.msra.mxu0 0
    %612 = vmatprep.subr.bf16.mxu0 0
    %613 = vmatpush1.bf16.msra.mxu0 0
    %614 = vmatprep.subr.bf16.mxu0 0
    %615 = vmatpush1.bf16.msra.mxu0 0
    %616 = vmatprep.subr.bf16.mxu0 0
    %617 = vmatpush1.bf16.msra.mxu0 0
    %618 = vmatprep.subr.bf16.mxu0 0
    %619 = vmatpush1.bf16.msra.mxu0 0
    %620 = vmatprep.subr.bf16.mxu0 0
    %621 = vmatpush1.bf16.msra.mxu0 0
    %622 = vmatprep.subr.bf16.mxu0 0
    %623 = vmatpush1.bf16.msra.mxu0 0
    %624 = vmatprep.subr.bf16.mxu0 0
    %625 = vmatpush1.bf16.msra.mxu0 0
    %626 = vmatprep.mubr.bf16.mxu0 0
    %627 = vmatmul.mubr.bf16.gmra.mrb[0].mxu0 %v591
    %v628 = vpop.f32.mrb[0].mxu0
    %v629 = vadd.f32 0.0, %v628
    %v630 = vpop.f32.mrb[0].mxu0
    %v631 = vadd.f32 0.0, %v630
    %v632 = vpop.f32.mrb[0].mxu0
    %v633 = vadd.f32 0.0, %v632
    %v634 = vpop.f32.mrb[0].mxu0
    %v635 = vadd.f32 0.0, %v634
    %636 = vmatprep.mubr.bf16.mxu0 0
    %637 = vmatmul.mubr.bf16.gmra.mrb[0].mxu0 %v592
    %v638 = vpop.f32.mrb[0].mxu0
    %v639 = vadd.f32 0.0, %v638
    %v640 = vpop.f32.mrb[0].mxu0
    %v641 = vadd.f32 0.0, %v640
    %v642 = vpop.f32.mrb[0].mxu0
    %v643 = vadd.f32 0.0, %v642
    %v644 = vpop.f32.mrb[0].mxu0
    %v645 = vadd.f32 0.0, %v644
    %646 = vmatprep.mubr.bf16.mxu0 0
    %647 = vmatmul.mubr.bf16.gmra.mrb[0].mxu0 %v593
    %v648 = vpop.f32.mrb[0].mxu0
    %v649 = vadd.f32 0.0, %v648
    %v650 = vpop.f32.mrb[0].mxu0
    %v651 = vadd.f32 0.0, %v650
    %v652 = vpop.f32.mrb[0].mxu0
    %v653 = vpop.f32.mrb[0].mxu0
    %654 = vdwg.mxu0
    %655 = vmatprep.subr.bf16.mxu0 0
    %656 = vmatpush1.bf16.msra.mxu0 %v355
    %657 = vmatprep.subr.bf16.mxu0 0
    %658 = vmatpush1.bf16.msra.mxu0 %v358
    %659 = vmatprep.subr.bf16.mxu0 0
    %660 = vmatpush1.bf16.msra.mxu0 %v361
    %661 = vmatprep.subr.bf16.mxu0 0
    %662 = vmatpush1.bf16.msra.mxu0 %v364
    %663 = vmatprep.subr.bf16.mxu0 0
    %664 = vmatpush1.bf16.msra.mxu0 %v367
    %665 = vmatprep.subr.bf16.mxu0 0
    %666 = vmatpush1.bf16.msra.mxu0 %v370
    %667 = vmatprep.subr.bf16.mxu0 0
    %668 = vmatpush1.bf16.msra.mxu0 %v373
    %669 = vmatprep.subr.bf16.mxu0 0
    %670 = vmatpush1.bf16.msra.mxu0 %v376
    %671 = vmatprep.subr.bf16.mxu0 0
    %672 = vmatpush1.bf16.msra.mxu0 0
    %673 = vmatprep.subr.bf16.mxu0 0
    %674 = vmatpush1.bf16.msra.mxu0 0
    %675 = vmatprep.subr.bf16.mxu0 0
    %676 = vmatpush1.bf16.msra.mxu0 0
    %677 = vmatprep.subr.bf16.mxu0 0
    %678 = vmatpush1.bf16.msra.mxu0 0
    %679 = vmatprep.subr.bf16.mxu0 0
    %680 = vmatpush1.bf16.msra.mxu0 0
    %681 = vmatprep.subr.bf16.mxu0 0
    %682 = vmatpush1.bf16.msra.mxu0 0
    %683 = vmatprep.subr.bf16.mxu0 0
    %684 = vmatpush1.bf16.msra.mxu0 0
    %685 = vmatprep.subr.bf16.mxu0 0
    %686 = vmatpush1.bf16.msra.mxu0 0
    %687 = vmatprep.mubr.bf16.mxu0 0
    %688 = vmatmul.mubr.bf16.gmra.mrb[0].mxu0 %v591
    %v689 = vpop.f32.mrb[0].mxu0
    %v690 = vadd.f32 0.0, %v689
    %v691 = vpop.f32.mrb[0].mxu0
    %v692 = vpop.f32.mrb[0].mxu0
    %v693 = vadd.f32 0.0, %v692
    %v694 = vpop.f32.mrb[0].mxu0
    %695 = vmatprep.mubr.bf16.mxu0 0
    %696 = vmatmul.mubr.bf16.gmra.mrb[0].mxu0 %v592
    %v697 = vpop.f32.mrb[0].mxu0
    %v698 = vadd.f32 0.0, %v697
    %v699 = vpop.f32.mrb[0].mxu0
    %v700 = vpop.f32.mrb[0].mxu0
    %v701 = vadd.f32 0.0, %v700
    %v702 = vpop.f32.mrb[0].mxu0
    %703 = vmatprep.mubr.bf16.mxu0 0
    %704 = vmatmul.mubr.bf16.gmra.mrb[0].mxu0 %v593
    %v705 = vpop.f32.mrb[0].mxu0
    %v706 = vadd.f32 0.0, %v705
    %v707 = vpop.f32.mrb[0].mxu0
    %v708 = vpop.f32.mrb[0].mxu0
    %v709 = vpop.f32.mrb[0].mxu0
    %710 = vdwg.mxu0
    %v711 = vrot.slane %v629, 7
    %v712 = vrot.slane %v633, 7
    %v713 = vrot.slane %v639, 7
    %v714 = vrot.slane %v643, 7
    %v715 = vrot.slane %v649, 7
    %v716 = vsel %vm525, %v714, %v715
    %v717 = vsel %vm525, %v713, %v714
    %v718 = vsel %vm525, %v712, %v713
    %v719 = vsel %vm525, %v711, %v712
    %v720 = vsel %vm525, %v715, %v711
    %v721 = vadd.f32 %v720, %v631
    %v722 = vadd.f32 %v719, %v635
    %v723 = vadd.f32 %v718, %v641
    %v724 = vadd.f32 %v717, %v645
    %v725 = vadd.f32 %v716, %v651
    %v726 = vrot.slane %v690, 1
    %v727 = vrot.slane %v693, 1
    %v728 = vrot.slane %v698, 1
    %v729 = vrot.slane %v701, 1
    %v730 = vrot.slane %v706, 1
    %v731 = vsel %vm541, %v729, %v730
    %v732 = vsel %vm541, %v728, %v729
    %v733 = vsel %vm541, %v727, %v728
    %v734 = vsel %vm541, %v726, %v727
    %v735 = vsel %vm541, %v730, %v726
    %v736 = vadd.f32 %v721, %v734
    %v737 = vadd.f32 %v722, %v733
    %v738 = vadd.f32 %v723, %v732
    %v739 = vadd.f32 %v724, %v731
    %v740 = vadd.f32 %v725, %v735
    %v741 = vmul.f32 %v736, %v557
    %v742 = vmul.f32 %v737, %v557
    %v743 = vmul.f32 %v738, %v557
    %v744 = vmul.f32 %v739, %v557
    %v745 = vmul.f32 %v740, %v557
    %v746 = vadd.f32 %v741, %v569
    %v747 = vadd.f32 %v742, %v569
    %v748 = vadd.f32 %v743, %v569
    %v749 = vadd.f32 %v744, %v569
    %v750 = vadd.f32 %v745, %v569
    %v751 = vmax.f32 %v746, 0.0
    %v752 = vmax.f32 %v747, 0.0
    %v753 = vmax.f32 %v748, 0.0
    %v754 = vmax.f32 %v749, 0.0
    %v755 = vmax.f32 %v750, 0.0
    %v756 = vmul.f32 %v751, %v105
    %v757 = vmul.f32 %v752, %v106
    %v758 = vmul.f32 %v753, %v107
    %v759 = vmul.f32 %v754, %v108
    %v760 = vmul.f32 %v755, %v109
    %v761 = vadd.f32 %v233, %v756
    %v762 = vadd.f32 %v234, %v757
    %v763 = vadd.f32 %v235, %v758
    %v764 = vadd.f32 %v236, %v759
    %v765 = vadd.f32 %v237, %v760
    %v766 = vpack.c.bf16 %v762, %v761
    %v767 = vpack.c.bf16 %v764, %v763
    %v768 = vpack.c.bf16 %v765, %v765
    %769 = vmatprep.subr.bf16.mxu0 %v354
    %770 = vmatpush1.bf16.msra.mxu0 %v353
    %771 = vmatprep.subr.bf16.mxu0 %v357
    %772 = vmatpush1.bf16.msra.mxu0 %v356
    %773 = vmatprep.subr.bf16.mxu0 %v360
    %774 = vmatpush1.bf16.msra.mxu0 %v359
    %775 = vmatprep.subr.bf16.mxu0 %v363
    %776 = vmatpush1.bf16.msra.mxu0 %v362
    %777 = vmatprep.subr.bf16.mxu0 %v366
    %778 = vmatpush1.bf16.msra.mxu0 %v365
    %779 = vmatprep.subr.bf16.mxu0 %v369
    %780 = vmatpush1.bf16.msra.mxu0 %v368
    %781 = vmatprep.subr.bf16.mxu0 %v372
    %782 = vmatpush1.bf16.msra.mxu0 %v371
    %783 = vmatprep.subr.bf16.mxu0 %v375
    %784 = vmatpush1.bf16.msra.mxu0 %v374
    %785 = vmatprep.subr.bf16.mxu0 0
    %786 = vmatpush1.bf16.msra.mxu0 0
    %787 = vmatprep.subr.bf16.mxu0 0
    %788 = vmatpush1.bf16.msra.mxu0 0
    %789 = vmatprep.subr.bf16.mxu0 0
    %790 = vmatpush1.bf16.msra.mxu0 0
    %791 = vmatprep.subr.bf16.mxu0 0
    %792 = vmatpush1.bf16.msra.mxu0 0
    %793 = vmatprep.subr.bf16.mxu0 0
    %794 = vmatpush1.bf16.msra.mxu0 0
    %795 = vmatprep.subr.bf16.mxu0 0
    %796 = vmatpush1.bf16.msra.mxu0 0
    %797 = vmatprep.subr.bf16.mxu0 0
    %798 = vmatpush1.bf16.msra.mxu0 0
    %799 = vmatprep.subr.bf16.mxu0 0
    %800 = vmatpush1.bf16.msra.mxu0 0
    %801 = vmatprep.mubr.bf16.mxu0 0
    %802 = vmatmul.mubr.bf16.gmra.mrb[0].mxu0 %v766
    %v803 = vpop.f32.mrb[0].mxu0
    %v804 = vadd.f32 0.0, %v803
    %v805 = vpop.f32.mrb[0].mxu0
    %v806 = vadd.f32 0.0, %v805
    %v807 = vpop.f32.mrb[0].mxu0
    %v808 = vadd.f32 0.0, %v807
    %v809 = vpop.f32.mrb[0].mxu0
    %v810 = vadd.f32 0.0, %v809
    %811 = vmatprep.mubr.bf16.mxu0 0
    %812 = vmatmul.mubr.bf16.gmra.mrb[0].mxu0 %v767
    %v813 = vpop.f32.mrb[0].mxu0
    %v814 = vadd.f32 0.0, %v813
    %v815 = vpop.f32.mrb[0].mxu0
    %v816 = vadd.f32 0.0, %v815
    %v817 = vpop.f32.mrb[0].mxu0
    %v818 = vadd.f32 0.0, %v817
    %v819 = vpop.f32.mrb[0].mxu0
    %v820 = vadd.f32 0.0, %v819
    %821 = vmatprep.mubr.bf16.mxu0 0
    %822 = vmatmul.mubr.bf16.gmra.mrb[0].mxu0 %v768
    %v823 = vpop.f32.mrb[0].mxu0
    %v824 = vadd.f32 0.0, %v823
    %v825 = vpop.f32.mrb[0].mxu0
    %v826 = vadd.f32 0.0, %v825
    %v827 = vpop.f32.mrb[0].mxu0
    %v828 = vpop.f32.mrb[0].mxu0
    %829 = vdwg.mxu0
    %830 = vmatprep.subr.bf16.mxu0 0
    %831 = vmatpush1.bf16.msra.mxu0 %v355
    %832 = vmatprep.subr.bf16.mxu0 0
    %833 = vmatpush1.bf16.msra.mxu0 %v358
    %834 = vmatprep.subr.bf16.mxu0 0
    %835 = vmatpush1.bf16.msra.mxu0 %v361
    %836 = vmatprep.subr.bf16.mxu0 0
    %837 = vmatpush1.bf16.msra.mxu0 %v364
    %838 = vmatprep.subr.bf16.mxu0 0
    %839 = vmatpush1.bf16.msra.mxu0 %v367
    %840 = vmatprep.subr.bf16.mxu0 0
    %841 = vmatpush1.bf16.msra.mxu0 %v370
    %842 = vmatprep.subr.bf16.mxu0 0
    %843 = vmatpush1.bf16.msra.mxu0 %v373
    %844 = vmatprep.subr.bf16.mxu0 0
    %845 = vmatpush1.bf16.msra.mxu0 %v376
    %846 = vmatprep.subr.bf16.mxu0 0
    %847 = vmatpush1.bf16.msra.mxu0 0
    %848 = vmatprep.subr.bf16.mxu0 0
    %849 = vmatpush1.bf16.msra.mxu0 0
    %850 = vmatprep.subr.bf16.mxu0 0
    %851 = vmatpush1.bf16.msra.mxu0 0
    %852 = vmatprep.subr.bf16.mxu0 0
    %853 = vmatpush1.bf16.msra.mxu0 0
    %854 = vmatprep.subr.bf16.mxu0 0
    %855 = vmatpush1.bf16.msra.mxu0 0
    %856 = vmatprep.subr.bf16.mxu0 0
    %857 = vmatpush1.bf16.msra.mxu0 0
    %858 = vmatprep.subr.bf16.mxu0 0
    %859 = vmatpush1.bf16.msra.mxu0 0
    %860 = vmatprep.subr.bf16.mxu0 0
    %861 = vmatpush1.bf16.msra.mxu0 0
    %862 = vmatprep.mubr.bf16.mxu0 0
    %863 = vmatmul.mubr.bf16.gmra.mrb[0].mxu0 %v766
    %v864 = vpop.f32.mrb[0].mxu0
    %v865 = vadd.f32 0.0, %v864
    %v866 = vpop.f32.mrb[0].mxu0
    %v867 = vpop.f32.mrb[0].mxu0
    %v868 = vadd.f32 0.0, %v867
    %v869 = vpop.f32.mrb[0].mxu0
    %870 = vmatprep.mubr.bf16.mxu0 0
    %871 = vmatmul.mubr.bf16.gmra.mrb[0].mxu0 %v767
    %v872 = vpop.f32.mrb[0].mxu0
    %v873 = vadd.f32 0.0, %v872
    %v874 = vpop.f32.mrb[0].mxu0
    %v875 = vpop.f32.mrb[0].mxu0
    %v876 = vadd.f32 0.0, %v875
    %v877 = vpop.f32.mrb[0].mxu0
    %878 = vmatprep.mubr.bf16.mxu0 0
    %879 = vmatmul.mubr.bf16.gmra.mrb[0].mxu0 %v768
    %v880 = vpop.f32.mrb[0].mxu0
    %v881 = vadd.f32 0.0, %v880
    %v882 = vpop.f32.mrb[0].mxu0
    %v883 = vpop.f32.mrb[0].mxu0
    %v884 = vpop.f32.mrb[0].mxu0
    %885 = vdwg.mxu0
    %v886 = vrot.slane %v804, 7
    %v887 = vrot.slane %v808, 7
    %v888 = vrot.slane %v814, 7
    %v889 = vrot.slane %v818, 7
    %v890 = vrot.slane %v824, 7
    %v891 = vsel %vm525, %v889, %v890
    %v892 = vsel %vm525, %v888, %v889
    %v893 = vsel %vm525, %v887, %v888
    %v894 = vsel %vm525, %v886, %v887
    %v895 = vsel %vm525, %v890, %v886
    %v896 = vadd.f32 %v895, %v806
    %v897 = vadd.f32 %v894, %v810
    %v898 = vadd.f32 %v893, %v816
    %v899 = vadd.f32 %v892, %v820
    %v900 = vadd.f32 %v891, %v826
    %v901 = vrot.slane %v865, 1
    %v902 = vrot.slane %v868, 1
    %v903 = vrot.slane %v873, 1
    %v904 = vrot.slane %v876, 1
    %v905 = vrot.slane %v881, 1
    %v906 = vsel %vm541, %v904, %v905
    %v907 = vsel %vm541, %v903, %v904
    %v908 = vsel %vm541, %v902, %v903
    %v909 = vsel %vm541, %v901, %v902
    %v910 = vsel %vm541, %v905, %v901
    %v911 = vadd.f32 %v896, %v909
    %v912 = vadd.f32 %v897, %v908
    %v913 = vadd.f32 %v898, %v907
    %v914 = vadd.f32 %v899, %v906
    %v915 = vadd.f32 %v900, %v910
    %v916 = vmul.f32 %v911, %v557
    %v917 = vmul.f32 %v912, %v557
    %v918 = vmul.f32 %v913, %v557
    %v919 = vmul.f32 %v914, %v557
    %v920 = vmul.f32 %v915, %v557
    %v921 = vadd.f32 %v916, %v569
    %v922 = vadd.f32 %v917, %v569
    %v923 = vadd.f32 %v918, %v569
    %v924 = vadd.f32 %v919, %v569
    %v925 = vadd.f32 %v920, %v569
    %v926 = vmax.f32 %v921, 0.0
    %v927 = vmax.f32 %v922, 0.0
    %v928 = vmax.f32 %v923, 0.0
    %v929 = vmax.f32 %v924, 0.0
    %v930 = vmax.f32 %v925, 0.0
    %v931 = vmul.f32 %v926, %v105
    %v932 = vmul.f32 %v927, %v106
    %v933 = vmul.f32 %v928, %v107
    %v934 = vmul.f32 %v929, %v108
    %v935 = vmul.f32 %v930, %v109
    %v936 = vpack.c.bf16 %v932, %v931
    %v937 = vpack.c.bf16 %v934, %v933
    %v938 = vpack.c.bf16 %v935, %v935
    %v939 = vld [vmem:[#allocation10] sm:$0xff]
    %v940 = vld [vmem:[#allocation10 + $0x8] sm:$0xf]
    %v941 = vld [vmem:[#allocation10 + $0xc] sm:$0xff]
    %v942 = vld [vmem:[#allocation10 + $0x14] sm:$0xf]
    %v943 = vld [vmem:[#allocation10 + $0x18] sm:$0xff]
    %v944 = vld [vmem:[#allocation10 + $0x20] sm:$0xf]
    %v945 = vld [vmem:[#allocation10 + $0x24] sm:$0xff]
    %v946 = vld [vmem:[#allocation10 + $0x2c] sm:$0xf]
    %v947 = vld [vmem:[#allocation10 + $0x30] sm:$0xff]
    %v948 = vld [vmem:[#allocation10 + $0x38] sm:$0xf]
    %v949 = vld [vmem:[#allocation10 + $0x3c] sm:$0xff]
    %v950 = vld [vmem:[#allocation10 + $0x44] sm:$0xf]
    %v951 = vld [vmem:[#allocation10 + $0x48] sm:$0xff]
    %v952 = vld [vmem:[#allocation10 + $0x50] sm:$0xf]
    %v953 = vld [vmem:[#allocation10 + $0x54] sm:$0xff]
    %v954 = vld [vmem:[#allocation10 + $0x5c] sm:$0xf]
    %v955 = vld [vmem:[#allocation10 + $0x60] sm:$0xff]
    %v956 = vld [vmem:[#allocation10 + $0x68] sm:$0xf]
    %v957 = vld [vmem:[#allocation10 + $0x6c] sm:$0xff]
    %v958 = vld [vmem:[#allocation10 + $0x74] sm:$0xf]
    %v959 = vld [vmem:[#allocation10 + $0x78] sm:$0xff]
    %v960 = vld [vmem:[#allocation10 + $0x80] sm:$0xf]
    %v961 = vld [vmem:[#allocation10 + $0x84] sm:$0xff]
    %v962 = vld [vmem:[#allocation10 + $0x8c] sm:$0xf]
    %v963 = vld [vmem:[#allocation10 + $0x90] sm:$0xff]
    %v964 = vld [vmem:[#allocation10 + $0x98] sm:$0xf]
    %v965 = vld [vmem:[#allocation10 + $0x9c] sm:$0xff]
    %v966 = vld [vmem:[#allocation10 + $0xa4] sm:$0xf]
    %v967 = vld [vmem:[#allocation10 + $0xa8] sm:$0xff]
    %v968 = vld [vmem:[#allocation10 + $0xb0] sm:$0xf]
    %v969 = vld [vmem:[#allocation10 + $0xb4] sm:$0xff]
    %v970 = vld [vmem:[#allocation10 + $0xbc] sm:$0xf]
    %v1003 = vunpack.c.l.b16 %v939
    %v1004 = vunpack.c.h.b16 %v939
    %v1005 = vunpack.c.l.b16 %v940
    %v1006 = vunpack.c.l.b16 %v941
    %v1007 = vunpack.c.h.b16 %v941
    %v1008 = vunpack.c.l.b16 %v942
    %v1009 = vunpack.c.l.b16 %v943
    %v1010 = vunpack.c.h.b16 %v943
    %v1011 = vunpack.c.l.b16 %v944
    %v1012 = vunpack.c.l.b16 %v945
    %v1013 = vunpack.c.h.b16 %v945
    %v1014 = vunpack.c.l.b16 %v946
    %v1015 = vunpack.c.l.b16 %v947
    %v1016 = vunpack.c.h.b16 %v947
    %v1017 = vunpack.c.l.b16 %v948
    %v1018 = vunpack.c.l.b16 %v949
    %v1019 = vunpack.c.h.b16 %v949
    %v1020 = vunpack.c.l.b16 %v950
    %v1021 = vunpack.c.l.b16 %v951
    %v1022 = vunpack.c.h.b16 %v951
    %v1023 = vunpack.c.l.b16 %v952
    %v1024 = vunpack.c.l.b16 %v953
    %v1025 = vunpack.c.h.b16 %v953
    %v1026 = vunpack.c.l.b16 %v954
    %v1027 = vunpack.c.l.b16 %v955
    %v1028 = vunpack.c.h.b16 %v955
    %v1029 = vunpack.c.l.b16 %v956
    %v1030 = vunpack.c.l.b16 %v957
    %v1031 = vunpack.c.h.b16 %v957
    %v1032 = vunpack.c.l.b16 %v958
    %v1033 = vunpack.c.l.b16 %v959
    %v1034 = vunpack.c.h.b16 %v959
    %v1035 = vunpack.c.l.b16 %v960
    %v1036 = vunpack.c.l.b16 %v961
    %v1037 = vunpack.c.h.b16 %v961
    %v1038 = vunpack.c.l.b16 %v962
    %v1039 = vunpack.c.l.b16 %v963
    %v1040 = vunpack.c.h.b16 %v963
    %v1041 = vunpack.c.l.b16 %v964
    %v1042 = vunpack.c.l.b16 %v965
    %v1043 = vunpack.c.h.b16 %v965
    %v1044 = vunpack.c.l.b16 %v966
    %v1045 = vunpack.c.l.b16 %v967
    %v1046 = vunpack.c.h.b16 %v967
    %v1047 = vunpack.c.l.b16 %v968
    %v1048 = vunpack.c.l.b16 %v969
    %v1049 = vunpack.c.h.b16 %v969
    %v1050 = vunpack.c.l.b16 %v970
    %v1051 = vpack.c.b16 %v1006, %v1003
    %v1052 = vpack.c.b16 %v1007, %v1004
    %v1053 = vpack.c.b16 %v1008, %v1005
    %v1054 = vpack.c.b16 %v1012, %v1009
    %v1055 = vpack.c.b16 %v1013, %v1010
    %v1056 = vpack.c.b16 %v1014, %v1011
    %v1057 = vpack.c.b16 %v1018, %v1015
    %v1058 = vpack.c.b16 %v1019, %v1016
    %v1059 = vpack.c.b16 %v1020, %v1017
    %v1060 = vpack.c.b16 %v1024, %v1021
    %v1061 = vpack.c.b16 %v1025, %v1022
    %v1062 = vpack.c.b16 %v1026, %v1023
    %v1063 = vpack.c.b16 %v1030, %v1027
    %v1064 = vpack.c.b16 %v1031, %v1028
    %v1065 = vpack.c.b16 %v1032, %v1029
    %v1066 = vpack.c.b16 %v1036, %v1033
    %v1067 = vpack.c.b16 %v1037, %v1034
    %v1068 = vpack.c.b16 %v1038, %v1035
    %v1069 = vpack.c.b16 %v1042, %v1039
    %v1070 = vpack.c.b16 %v1043, %v1040
    %v1071 = vpack.c.b16 %v1044, %v1041
    %v1072 = vpack.c.b16 %v1048, %v1045
    %v1073 = vpack.c.b16 %v1049, %v1046
    %v1074 = vpack.c.b16 %v1050, %v1047
    %1099 = vmatprep.subr.bf16.mxu0 %v1052
    %1100 = vmatpush1.bf16.msra.mxu0 %v1051
    %1101 = vmatprep.subr.bf16.mxu0 %v1055
    %1102 = vmatpush1.bf16.msra.mxu0 %v1054
    %1103 = vmatprep.subr.bf16.mxu0 %v1058
    %1104 = vmatpush1.bf16.msra.mxu0 %v1057
    %1105 = vmatprep.subr.bf16.mxu0 %v1061
    %1106 = vmatpush1.bf16.msra.mxu0 %v1060
    %1107 = vmatprep.subr.bf16.mxu0 %v1064
    %1108 = vmatpush1.bf16.msra.mxu0 %v1063
    %1109 = vmatprep.subr.bf16.mxu0 %v1067
    %1110 = vmatpush1.bf16.msra.mxu0 %v1066
    %1111 = vmatprep.subr.bf16.mxu0 %v1070
    %1112 = vmatpush1.bf16.msra.mxu0 %v1069
    %1113 = vmatprep.subr.bf16.mxu0 %v1073
    %1114 = vmatpush1.bf16.msra.mxu0 %v1072
    %1115 = vmatprep.subr.bf16.mxu0 0
    %1116 = vmatpush1.bf16.msra.mxu0 0
    %1117 = vmatprep.subr.bf16.mxu0 0
    %1118 = vmatpush1.bf16.msra.mxu0 0
    %1119 = vmatprep.subr.bf16.mxu0 0
    %1120 = vmatpush1.bf16.msra.mxu0 0
    %1121 = vmatprep.subr.bf16.mxu0 0
    %1122 = vmatpush1.bf16.msra.mxu0 0
    %1123 = vmatprep.subr.bf16.mxu0 0
    %1124 = vmatpush1.bf16.msra.mxu0 0
    %1125 = vmatprep.subr.bf16.mxu0 0
    %1126 = vmatpush1.bf16.msra.mxu0 0
    %1127 = vmatprep.subr.bf16.mxu0 0
    %1128 = vmatpush1.bf16.msra.mxu0 0
    %1129 = vmatprep.subr.bf16.mxu0 0
    %1130 = vmatpush1.bf16.msra.mxu0 0
    %1131 = vmatprep.mubr.bf16.mxu0 0
    %1132 = vmatmul.mubr.bf16.gmra.mrb[0].mxu0 %v936
    %v1133 = vpop.f32.mrb[0].mxu0
    %v1134 = vadd.f32 0.0, %v1133
    %v1135 = vpop.f32.mrb[0].mxu0
    %v1136 = vadd.f32 0.0, %v1135
    %v1137 = vpop.f32.mrb[0].mxu0
    %v1138 = vadd.f32 0.0, %v1137
    %v1139 = vpop.f32.mrb[0].mxu0
    %v1140 = vadd.f32 0.0, %v1139
    %1141 = vmatprep.mubr.bf16.mxu0 0
    %1142 = vmatmul.mubr.bf16.gmra.mrb[0].mxu0 %v937
    %v1143 = vpop.f32.mrb[0].mxu0
    %v1144 = vadd.f32 0.0, %v1143
    %v1145 = vpop.f32.mrb[0].mxu0
    %v1146 = vadd.f32 0.0, %v1145
    %v1147 = vpop.f32.mrb[0].mxu0
    %v1148 = vadd.f32 0.0, %v1147
    %v1149 = vpop.f32.mrb[0].mxu0
    %v1150 = vadd.f32 0.0, %v1149
    %1151 = vmatprep.mubr.bf16.mxu0 0
    %1152 = vmatmul.mubr.bf16.gmra.mrb[0].mxu0 %v938
    %v1153 = vpop.f32.mrb[0].mxu0
    %v1154 = vadd.f32 0.0, %v1153
    %v1155 = vpop.f32.mrb[0].mxu0
    %v1156 = vadd.f32 0.0, %v1155
    %v1157 = vpop.f32.mrb[0].mxu0
    %v1158 = vpop.f32.mrb[0].mxu0
    %1159 = vdwg.mxu0
    %1160 = vmatprep.subr.bf16.mxu0 0
    %1161 = vmatpush1.bf16.msra.mxu0 %v1053
    %1162 = vmatprep.subr.bf16.mxu0 0
    %1163 = vmatpush1.bf16.msra.mxu0 %v1056
    %1164 = vmatprep.subr.bf16.mxu0 0
    %1165 = vmatpush1.bf16.msra.mxu0 %v1059
    %1166 = vmatprep.subr.bf16.mxu0 0
    %1167 = vmatpush1.bf16.msra.mxu0 %v1062
    %1168 = vmatprep.subr.bf16.mxu0 0
    %1169 = vmatpush1.bf16.msra.mxu0 %v1065
    %1170 = vmatprep.subr.bf16.mxu0 0
    %1171 = vmatpush1.bf16.msra.mxu0 %v1068
    %1172 = vmatprep.subr.bf16.mxu0 0
    %1173 = vmatpush1.bf16.msra.mxu0 %v1071
    %1174 = vmatprep.subr.bf16.mxu0 0
    %1175 = vmatpush1.bf16.msra.mxu0 %v1074
    %1176 = vmatprep.subr.bf16.mxu0 0
    %1177 = vmatpush1.bf16.msra.mxu0 0
    %1178 = vmatprep.subr.bf16.mxu0 0
    %1179 = vmatpush1.bf16.msra.mxu0 0
    %1180 = vmatprep.subr.bf16.mxu0 0
    %1181 = vmatpush1.bf16.msra.mxu0 0
    %1182 = vmatprep.subr.bf16.mxu0 0
    %1183 = vmatpush1.bf16.msra.mxu0 0
    %1184 = vmatprep.subr.bf16.mxu0 0
    %1185 = vmatpush1.bf16.msra.mxu0 0
    %1186 = vmatprep.subr.bf16.mxu0 0
    %1187 = vmatpush1.bf16.msra.mxu0 0
    %1188 = vmatprep.subr.bf16.mxu0 0
    %1189 = vmatpush1.bf16.msra.mxu0 0
    %1190 = vmatprep.subr.bf16.mxu0 0
    %1191 = vmatpush1.bf16.msra.mxu0 0
    %1192 = vmatprep.mubr.bf16.mxu0 0
    %1193 = vmatmul.mubr.bf16.gmra.mrb[0].mxu0 %v936
    %v1194 = vpop.f32.mrb[0].mxu0
    %v1195 = vadd.f32 0.0, %v1194
    %v1196 = vpop.f32.mrb[0].mxu0
    %v1197 = vpop.f32.mrb[0].mxu0
    %v1198 = vadd.f32 0.0, %v1197
    %v1199 = vpop.f32.mrb[0].mxu0
    %1200 = vmatprep.mubr.bf16.mxu0 0
    %1201 = vmatmul.mubr.bf16.gmra.mrb[0].mxu0 %v937
    %v1202 = vpop.f32.mrb[0].mxu0
    %v1203 = vadd.f32 0.0, %v1202
    %v1204 = vpop.f32.mrb[0].mxu0
    %v1205 = vpop.f32.mrb[0].mxu0
    %v1206 = vadd.f32 0.0, %v1205
    %v1207 = vpop.f32.mrb[0].mxu0
    %1208 = vmatprep.mubr.bf16.mxu0 0
    %1209 = vmatmul.mubr.bf16.gmra.mrb[0].mxu0 %v938
    %v1210 = vpop.f32.mrb[0].mxu0
    %v1211 = vadd.f32 0.0, %v1210
    %v1212 = vpop.f32.mrb[0].mxu0
    %v1213 = vpop.f32.mrb[0].mxu0
    %v1214 = vpop.f32.mrb[0].mxu0
    %1215 = vdwg.mxu0
    %v1216 = vrot.slane %v1134, 7
    %v1217 = vrot.slane %v1138, 7
    %v1218 = vrot.slane %v1144, 7
    %v1219 = vrot.slane %v1148, 7
    %v1220 = vrot.slane %v1154, 7
    %v1221 = vsel %vm525, %v1219, %v1220
    %v1222 = vsel %vm525, %v1218, %v1219
    %v1223 = vsel %vm525, %v1217, %v1218
    %v1224 = vsel %vm525, %v1216, %v1217
    %v1225 = vsel %vm525, %v1220, %v1216
    %v1226 = vadd.f32 %v1225, %v1136
    %v1227 = vadd.f32 %v1224, %v1140
    %v1228 = vadd.f32 %v1223, %v1146
    %v1229 = vadd.f32 %v1222, %v1150
    %v1230 = vadd.f32 %v1221, %v1156
    %v1231 = vrot.slane %v1195, 1
    %v1232 = vrot.slane %v1198, 1
    %v1233 = vrot.slane %v1203, 1
    %v1234 = vrot.slane %v1206, 1
    %v1235 = vrot.slane %v1211, 1
    %v1236 = vsel %vm541, %v1234, %v1235
    %v1237 = vsel %vm541, %v1233, %v1234
    %v1238 = vsel %vm541, %v1232, %v1233
    %v1239 = vsel %vm541, %v1231, %v1232
    %v1240 = vsel %vm541, %v1235, %v1231
    %v1241 = vadd.f32 %v1226, %v1239
    %v1242 = vadd.f32 %v1227, %v1238
    %v1243 = vadd.f32 %v1228, %v1237
    %v1244 = vadd.f32 %v1229, %v1236
    %v1245 = vadd.f32 %v1230, %v1240
    %v1246 = vld [vmem:[%s8] sm:$0x1]
    %v1248 = vlaneseq
    %v1249 = vshrl.u32 %v1248, 7
    %v1250 = vsub.s32 0, %v1249
    %v1251 = vrot.slane %v1246, %v1250
    %v1253 = vmul.f32 %v1241, %v1251
    %v1254 = vmul.f32 %v1242, %v1251
    %v1255 = vmul.f32 %v1243, %v1251
    %v1256 = vmul.f32 %v1244, %v1251
    %v1257 = vmul.f32 %v1245, %v1251
    %v1258 = vld [vmem:[%s9] sm:$0x1]
    %v1260 = vlaneseq
    %v1261 = vshrl.u32 %v1260, 7
    %v1262 = vsub.s32 0, %v1261
    %v1263 = vrot.slane %v1258, %v1262
    %v1265 = vadd.f32 %v1253, %v1263
    %v1266 = vadd.f32 %v1254, %v1263
    %v1267 = vadd.f32 %v1255, %v1263
    %v1268 = vadd.f32 %v1256, %v1263
    %v1269 = vadd.f32 %v1257, %v1263
    %v1270 = vmax.f32 %v1265, 0.0
    %v1271 = vmax.f32 %v1266, 0.0
    %v1272 = vmax.f32 %v1267, 0.0
    %v1273 = vmax.f32 %v1268, 0.0
    %v1274 = vmax.f32 %v1269, 0.0
    %v1275 = vmul.f32 %v1270, %v105
    %v1276 = vmul.f32 %v1271, %v106
    %v1277 = vmul.f32 %v1272, %v107
    %v1278 = vmul.f32 %v1273, %v108
    %v1279 = vmul.f32 %v1274, %v109
    %v1280 = vadd.f32 %v931, %v1275
    %v1281 = vadd.f32 %v932, %v1276
    %v1282 = vadd.f32 %v933, %v1277
    %v1283 = vadd.f32 %v934, %v1278
    %v1284 = vadd.f32 %v935, %v1279
    %v1285 = vpack.c.bf16 %v1281, %v1280
    %v1286 = vpack.c.bf16 %v1283, %v1282
    %v1287 = vpack.c.bf16 %v1284, %v1284
    %1288 = vmatprep.subr.bf16.mxu0 %v1052
    %1289 = vmatpush1.bf16.msra.mxu0 %v1051
    %1290 = vmatprep.subr.bf16.mxu0 %v1055
    %1291 = vmatpush1.bf16.msra.mxu0 %v1054
    %1292 = vmatprep.subr.bf16.mxu0 %v1058
    %1293 = vmatpush1.bf16.msra.mxu0 %v1057
    %1294 = vmatprep.subr.bf16.mxu0 %v1061
    %1295 = vmatpush1.bf16.msra.mxu0 %v1060
    %1296 = vmatprep.subr.bf16.mxu0 %v1064
    %1297 = vmatpush1.bf16.msra.mxu0 %v1063
    %1298 = vmatprep.subr.bf16.mxu0 %v1067
    %1299 = vmatpush1.bf16.msra.mxu0 %v1066
    %1300 = vmatprep.subr.bf16.mxu0 %v1070
    %1301 = vmatpush1.bf16.msra.mxu0 %v1069
    %1302 = vmatprep.subr.bf16.mxu0 %v1073
    %1303 = vmatpush1.bf16.msra.mxu0 %v1072
    %1304 = vmatprep.subr.bf16.mxu0 0
    %1305 = vmatpush1.bf16.msra.mxu0 0
    %1306 = vmatprep.subr.bf16.mxu0 0
    %1307 = vmatpush1.bf16.msra.mxu0 0
    %1308 = vmatprep.subr.bf16.mxu0 0
    %1309 = vmatpush1.bf16.msra.mxu0 0
    %1310 = vmatprep.subr.bf16.mxu0 0
    %1311 = vmatpush1.bf16.msra.mxu0 0
    %1312 = vmatprep.subr.bf16.mxu0 0
    %1313 = vmatpush1.bf16.msra.mxu0 0
    %1314 = vmatprep.subr.bf16.mxu0 0
    %1315 = vmatpush1.bf16.msra.mxu0 0
    %1316 = vmatprep.subr.bf16.mxu0 0
    %1317 = vmatpush1.bf16.msra.mxu0 0
    %1318 = vmatprep.subr.bf16.mxu0 0
    %1319 = vmatpush1.bf16.msra.mxu0 0
    %1320 = vmatprep.mubr.bf16.mxu0 0
    %1321 = vmatmul.mubr.bf16.gmra.mrb[0].mxu0 %v1285
    %v1322 = vpop.f32.mrb[0].mxu0
    %v1323 = vadd.f32 0.0, %v1322
    %v1324 = vpop.f32.mrb[0].mxu0
    %v1325 = vadd.f32 0.0, %v1324
    %v1326 = vpop.f32.mrb[0].mxu0
    %v1327 = vadd.f32 0.0, %v1326
    %v1328 = vpop.f32.mrb[0].mxu0
    %v1329 = vadd.f32 0.0, %v1328
    %1330 = vmatprep.mubr.bf16.mxu0 0
    %1331 = vmatmul.mubr.bf16.gmra.mrb[0].mxu0 %v1286
    %v1332 = vpop.f32.mrb[0].mxu0
    %v1333 = vadd.f32 0.0, %v1332
    %v1334 = vpop.f32.mrb[0].mxu0
    %v1335 = vadd.f32 0.0, %v1334
    %v1336 = vpop.f32.mrb[0].mxu0
    %v1337 = vadd.f32 0.0, %v1336
    %v1338 = vpop.f32.mrb[0].mxu0
    %v1339 = vadd.f32 0.0, %v1338
    %1340 = vmatprep.mubr.bf16.mxu0 0
    %1341 = vmatmul.mubr.bf16.gmra.mrb[0].mxu0 %v1287
    %v1342 = vpop.f32.mrb[0].mxu0
    %v1343 = vadd.f32 0.0, %v1342
    %v1344 = vpop.f32.mrb[0].mxu0
    %v1345 = vadd.f32 0.0, %v1344
    %v1346 = vpop.f32.mrb[0].mxu0
    %v1347 = vpop.f32.mrb[0].mxu0
    %1348 = vdwg.mxu0
    %1349 = vmatprep.subr.bf16.mxu0 0
    %1350 = vmatpush1.bf16.msra.mxu0 %v1053
    %1351 = vmatprep.subr.bf16.mxu0 0
    %1352 = vmatpush1.bf16.msra.mxu0 %v1056
    %1353 = vmatprep.subr.bf16.mxu0 0
    %1354 = vmatpush1.bf16.msra.mxu0 %v1059
    %1355 = vmatprep.subr.bf16.mxu0 0
    %1356 = vmatpush1.bf16.msra.mxu0 %v1062
    %1357 = vmatprep.subr.bf16.mxu0 0
    %1358 = vmatpush1.bf16.msra.mxu0 %v1065
    %1359 = vmatprep.subr.bf16.mxu0 0
    %1360 = vmatpush1.bf16.msra.mxu0 %v1068
    %1361 = vmatprep.subr.bf16.mxu0 0
    %1362 = vmatpush1.bf16.msra.mxu0 %v1071
    %1363 = vmatprep.subr.bf16.mxu0 0
    %1364 = vmatpush1.bf16.msra.mxu0 %v1074
    %1365 = vmatprep.subr.bf16.mxu0 0
    %1366 = vmatpush1.bf16.msra.mxu0 0
    %1367 = vmatprep.subr.bf16.mxu0 0
    %1368 = vmatpush1.bf16.msra.mxu0 0
    %1369 = vmatprep.subr.bf16.mxu0 0
    %1370 = vmatpush1.bf16.msra.mxu0 0
    %1371 = vmatprep.subr.bf16.mxu0 0
    %1372 = vmatpush1.bf16.msra.mxu0 0
    %1373 = vmatprep.subr.bf16.mxu0 0
    %1374 = vmatpush1.bf16.msra.mxu0 0
    %1375 = vmatprep.subr.bf16.mxu0 0
    %1376 = vmatpush1.bf16.msra.mxu0 0
    %1377 = vmatprep.subr.bf16.mxu0 0
    %1378 = vmatpush1.bf16.msra.mxu0 0
    %1379 = vmatprep.subr.bf16.mxu0 0
    %1380 = vmatpush1.bf16.msra.mxu0 0
    %1381 = vmatprep.mubr.bf16.mxu0 0
    %1382 = vmatmul.mubr.bf16.gmra.mrb[0].mxu0 %v1285
    %v1383 = vpop.f32.mrb[0].mxu0
    %v1384 = vadd.f32 0.0, %v1383
    %v1385 = vpop.f32.mrb[0].mxu0
    %v1386 = vpop.f32.mrb[0].mxu0
    %v1387 = vadd.f32 0.0, %v1386
    %v1388 = vpop.f32.mrb[0].mxu0
    %1389 = vmatprep.mubr.bf16.mxu0 0
    %1390 = vmatmul.mubr.bf16.gmra.mrb[0].mxu0 %v1286
    %v1391 = vpop.f32.mrb[0].mxu0
    %v1392 = vadd.f32 0.0, %v1391
    %v1393 = vpop.f32.mrb[0].mxu0
    %v1394 = vpop.f32.mrb[0].mxu0
    %v1395 = vadd.f32 0.0, %v1394
    %v1396 = vpop.f32.mrb[0].mxu0
    %1397 = vmatprep.mubr.bf16.mxu0 0
    %1398 = vmatmul.mubr.bf16.gmra.mrb[0].mxu0 %v1287
    %v1399 = vpop.f32.mrb[0].mxu0
    %v1400 = vadd.f32 0.0, %v1399
    %v1401 = vpop.f32.mrb[0].mxu0
    %v1402 = vpop.f32.mrb[0].mxu0
    %v1403 = vpop.f32.mrb[0].mxu0
    %1404 = vdwg.mxu0
    %v1405 = vrot.slane %v1323, 7
    %v1406 = vrot.slane %v1327, 7
    %v1407 = vrot.slane %v1333, 7
    %v1408 = vrot.slane %v1337, 7
    %v1409 = vrot.slane %v1343, 7
    %v1410 = vsel %vm525, %v1408, %v1409
    %v1411 = vsel %vm525, %v1407, %v1408
    %v1412 = vsel %vm525, %v1406, %v1407
    %v1413 = vsel %vm525, %v1405, %v1406
    %v1414 = vsel %vm525, %v1409, %v1405
    %v1415 = vadd.f32 %v1414, %v1325
    %v1416 = vadd.f32 %v1413, %v1329
    %v1417 = vadd.f32 %v1412, %v1335
    %v1418 = vadd.f32 %v1411, %v1339
    %v1419 = vadd.f32 %v1410, %v1345
    %v1420 = vrot.slane %v1384, 1
    %v1421 = vrot.slane %v1387, 1
    %v1422 = vrot.slane %v1392, 1
    %v1423 = vrot.slane %v1395, 1
    %v1424 = vrot.slane %v1400, 1
    %v1425 = vsel %vm541, %v1423, %v1424
    %v1426 = vsel %vm541, %v1422, %v1423
    %v1427 = vsel %vm541, %v1421, %v1422
    %v1428 = vsel %vm541, %v1420, %v1421
    %v1429 = vsel %vm541, %v1424, %v1420
    %v1430 = vadd.f32 %v1415, %v1428
    %v1431 = vadd.f32 %v1416, %v1427
    %v1432 = vadd.f32 %v1417, %v1426
    %v1433 = vadd.f32 %v1418, %v1425
    %v1434 = vadd.f32 %v1419, %v1429
    %v1435 = vmul.f32 %v1430, %v1251
    %v1436 = vmul.f32 %v1431, %v1251
    %v1437 = vmul.f32 %v1432, %v1251
    %v1438 = vmul.f32 %v1433, %v1251
    %v1439 = vmul.f32 %v1434, %v1251
    %v1440 = vadd.f32 %v1435, %v1263
    %v1441 = vadd.f32 %v1436, %v1263
    %v1442 = vadd.f32 %v1437, %v1263
    %v1443 = vadd.f32 %v1438, %v1263
    %v1444 = vadd.f32 %v1439, %v1263
    %v1445 = vmax.f32 %v1440, 0.0
    %v1446 = vmax.f32 %v1441, 0.0
    %v1447 = vmax.f32 %v1442, 0.0
    %v1448 = vmax.f32 %v1443, 0.0
    %v1449 = vmax.f32 %v1444, 0.0
    %v1450 = vmul.f32 %v1445, %v105
    %v1451 = vmul.f32 %v1446, %v106
    %v1452 = vmul.f32 %v1447, %v107
    %v1453 = vmul.f32 %v1448, %v108
    %v1454 = vmul.f32 %v1449, %v109
    %v1455 = vadd.f32 %v931, %v1450
    %v1456 = vadd.f32 %v932, %v1451
    %v1457 = vadd.f32 %v933, %v1452
    %v1458 = vadd.f32 %v934, %v1453
    %v1459 = vadd.f32 %v935, %v1454
    %v1460 = vpack.c.bf16 %v1456, %v1455
    %v1461 = vpack.c.bf16 %v1458, %v1457
    %v1462 = vpack.c.bf16 %v1459, %v1459
    %1463 = vmatprep.subr.bf16.mxu0 %v1052
    %1464 = vmatpush1.bf16.msra.mxu0 %v1051
    %1465 = vmatprep.subr.bf16.mxu0 %v1055
    %1466 = vmatpush1.bf16.msra.mxu0 %v1054
    %1467 = vmatprep.subr.bf16.mxu0 %v1058
    %1468 = vmatpush1.bf16.msra.mxu0 %v1057
    %1469 = vmatprep.subr.bf16.mxu0 %v1061
    %1470 = vmatpush1.bf16.msra.mxu0 %v1060
    %1471 = vmatprep.subr.bf16.mxu0 %v1064
    %1472 = vmatpush1.bf16.msra.mxu0 %v1063
    %1473 = vmatprep.subr.bf16.mxu0 %v1067
    %1474 = vmatpush1.bf16.msra.mxu0 %v1066
    %1475 = vmatprep.subr.bf16.mxu0 %v1070
    %1476 = vmatpush1.bf16.msra.mxu0 %v1069
    %1477 = vmatprep.subr.bf16.mxu0 %v1073
    %1478 = vmatpush1.bf16.msra.mxu0 %v1072
    %1479 = vmatprep.subr.bf16.mxu0 0
    %1480 = vmatpush1.bf16.msra.mxu0 0
    %1481 = vmatprep.subr.bf16.mxu0 0
    %1482 = vmatpush1.bf16.msra.mxu0 0
    %1483 = vmatprep.subr.bf16.mxu0 0
    %1484 = vmatpush1.bf16.msra.mxu0 0
    %1485 = vmatprep.subr.bf16.mxu0 0
    %1486 = vmatpush1.bf16.msra.mxu0 0
    %1487 = vmatprep.subr.bf16.mxu0 0
    %1488 = vmatpush1.bf16.msra.mxu0 0
    %1489 = vmatprep.subr.bf16.mxu0 0
    %1490 = vmatpush1.bf16.msra.mxu0 0
    %1491 = vmatprep.subr.bf16.mxu0 0
    %1492 = vmatpush1.bf16.msra.mxu0 0
    %1493 = vmatprep.subr.bf16.mxu0 0
    %1494 = vmatpush1.bf16.msra.mxu0 0
    %1495 = vmatprep.mubr.bf16.mxu0 0
    %1496 = vmatmul.mubr.bf16.gmra.mrb[0].mxu0 %v1460
    %v1497 = vpop.f32.mrb[0].mxu0
    %v1498 = vadd.f32 0.0, %v1497
    %v1499 = vpop.f32.mrb[0].mxu0
    %v1500 = vadd.f32 0.0, %v1499
    %v1501 = vpop.f32.mrb[0].mxu0
    %v1502 = vadd.f32 0.0, %v1501
    %v1503 = vpop.f32.mrb[0].mxu0
    %v1504 = vadd.f32 0.0, %v1503
    %1505 = vmatprep.mubr.bf16.mxu0 0
    %1506 = vmatmul.mubr.bf16.gmra.mrb[0].mxu0 %v1461
    %v1507 = vpop.f32.mrb[0].mxu0
    %v1508 = vadd.f32 0.0, %v1507
    %v1509 = vpop.f32.mrb[0].mxu0
    %v1510 = vadd.f32 0.0, %v1509
    %v1511 = vpop.f32.mrb[0].mxu0
    %v1512 = vadd.f32 0.0, %v1511
    %v1513 = vpop.f32.mrb[0].mxu0
    %v1514 = vadd.f32 0.0, %v1513
    %1515 = vmatprep.mubr.bf16.mxu0 0
    %1516 = vmatmul.mubr.bf16.gmra.mrb[0].mxu0 %v1462
    %v1517 = vpop.f32.mrb[0].mxu0
    %v1518 = vadd.f32 0.0, %v1517
    %v1519 = vpop.f32.mrb[0].mxu0
    %v1520 = vadd.f32 0.0, %v1519
    %v1521 = vpop.f32.mrb[0].mxu0
    %v1522 = vpop.f32.mrb[0].mxu0
    %1523 = vdwg.mxu0
    %1524 = vmatprep.subr.bf16.mxu0 0
    %1525 = vmatpush1.bf16.msra.mxu0 %v1053
    %1526 = vmatprep.subr.bf16.mxu0 0
    %1527 = vmatpush1.bf16.msra.mxu0 %v1056
    %1528 = vmatprep.subr.bf16.mxu0 0
    %1529 = vmatpush1.bf16.msra.mxu0 %v1059
    %1530 = vmatprep.subr.bf16.mxu0 0
    %1531 = vmatpush1.bf16.msra.mxu0 %v1062
    %1532 = vmatprep.subr.bf16.mxu0 0
    %1533 = vmatpush1.bf16.msra.mxu0 %v1065
    %1534 = vmatprep.subr.bf16.mxu0 0
    %1535 = vmatpush1.bf16.msra.mxu0 %v1068
    %1536 = vmatprep.subr.bf16.mxu0 0
    %1537 = vmatpush1.bf16.msra.mxu0 %v1071
    %1538 = vmatprep.subr.bf16.mxu0 0
    %1539 = vmatpush1.bf16.msra.mxu0 %v1074
    %1540 = vmatprep.subr.bf16.mxu0 0
    %1541 = vmatpush1.bf16.msra.mxu0 0
    %1542 = vmatprep.subr.bf16.mxu0 0
    %1543 = vmatpush1.bf16.msra.mxu0 0
    %1544 = vmatprep.subr.bf16.mxu0 0
    %1545 = vmatpush1.bf16.msra.mxu0 0
    %1546 = vmatprep.subr.bf16.mxu0 0
    %1547 = vmatpush1.bf16.msra.mxu0 0
    %1548 = vmatprep.subr.bf16.mxu0 0
    %1549 = vmatpush1.bf16.msra.mxu0 0
    %1550 = vmatprep.subr.bf16.mxu0 0
    %1551 = vmatpush1.bf16.msra.mxu0 0
    %1552 = vmatprep.subr.bf16.mxu0 0
    %1553 = vmatpush1.bf16.msra.mxu0 0
    %1554 = vmatprep.subr.bf16.mxu0 0
    %1555 = vmatpush1.bf16.msra.mxu0 0
    %1556 = vmatprep.mubr.bf16.mxu0 0
    %1557 = vmatmul.mubr.bf16.gmra.mrb[0].mxu0 %v1460
    %v1558 = vpop.f32.mrb[0].mxu0
    %v1559 = vadd.f32 0.0, %v1558
    %v1560 = vpop.f32.mrb[0].mxu0
    %v1561 = vpop.f32.mrb[0].mxu0
    %v1562 = vadd.f32 0.0, %v1561
    %v1563 = vpop.f32.mrb[0].mxu0
    %1564 = vmatprep.mubr.bf16.mxu0 0
    %1565 = vmatmul.mubr.bf16.gmra.mrb[0].mxu0 %v1461
    %v1566 = vpop.f32.mrb[0].mxu0
    %v1567 = vadd.f32 0.0, %v1566
    %v1568 = vpop.f32.mrb[0].mxu0
    %v1569 = vpop.f32.mrb[0].mxu0
    %v1570 = vadd.f32 0.0, %v1569
    %v1571 = vpop.f32.mrb[0].mxu0
    %1572 = vmatprep.mubr.bf16.mxu0 0
    %1573 = vmatmul.mubr.bf16.gmra.mrb[0].mxu0 %v1462
    %v1574 = vpop.f32.mrb[0].mxu0
    %v1575 = vadd.f32 0.0, %v1574
    %v1576 = vpop.f32.mrb[0].mxu0
    %v1577 = vpop.f32.mrb[0].mxu0
    %v1578 = vpop.f32.mrb[0].mxu0
    %1579 = vdwg.mxu0
    %v1580 = vrot.slane %v1498, 7
    %v1581 = vrot.slane %v1502, 7
    %v1582 = vrot.slane %v1508, 7
    %v1583 = vrot.slane %v1512, 7
    %v1584 = vrot.slane %v1518, 7
    %v1585 = vsel %vm525, %v1583, %v1584
    %v1586 = vsel %vm525, %v1582, %v1583
    %v1587 = vsel %vm525, %v1581, %v1582
    %v1588 = vsel %vm525, %v1580, %v1581
    %v1589 = vsel %vm525, %v1584, %v1580
    %v1590 = vadd.f32 %v1589, %v1500
    %v1591 = vadd.f32 %v1588, %v1504
    %v1592 = vadd.f32 %v1587, %v1510
    %v1593 = vadd.f32 %v1586, %v1514
    %v1594 = vadd.f32 %v1585, %v1520
    %v1595 = vrot.slane %v1559, 1
    %v1596 = vrot.slane %v1562, 1
    %v1597 = vrot.slane %v1567, 1
    %v1598 = vrot.slane %v1570, 1
    %v1599 = vrot.slane %v1575, 1
    %v1600 = vsel %vm541, %v1598, %v1599
    %v1601 = vsel %vm541, %v1597, %v1598
    %v1602 = vsel %vm541, %v1596, %v1597
    %v1603 = vsel %vm541, %v1595, %v1596
    %v1604 = vsel %vm541, %v1599, %v1595
    %v1605 = vadd.f32 %v1590, %v1603
    %v1606 = vadd.f32 %v1591, %v1602
    %v1607 = vadd.f32 %v1592, %v1601
    %v1608 = vadd.f32 %v1593, %v1600
    %v1609 = vadd.f32 %v1594, %v1604
    %v1610 = vmul.f32 %v1605, %v1251
    %v1611 = vmul.f32 %v1606, %v1251
    %v1612 = vmul.f32 %v1607, %v1251
    %v1613 = vmul.f32 %v1608, %v1251
    %v1614 = vmul.f32 %v1609, %v1251
    %v1615 = vadd.f32 %v1610, %v1263
    %v1616 = vadd.f32 %v1611, %v1263
    %v1617 = vadd.f32 %v1612, %v1263
    %v1618 = vadd.f32 %v1613, %v1263
    %v1619 = vadd.f32 %v1614, %v1263
    %v1620 = vmax.f32 %v1615, 0.0
    %v1621 = vmax.f32 %v1616, 0.0
    %v1622 = vmax.f32 %v1617, 0.0
    %v1623 = vmax.f32 %v1618, 0.0
    %v1624 = vmax.f32 %v1619, 0.0
    %v1625 = vmul.f32 %v1620, %v105
    %v1626 = vmul.f32 %v1621, %v106
    %v1627 = vmul.f32 %v1622, %v107
    %v1628 = vmul.f32 %v1623, %v108
    %v1629 = vmul.f32 %v1624, %v109
    %v1630 = vadd.f32 %v233, %v1625
    %v1631 = vadd.f32 %v234, %v1626
    %v1632 = vadd.f32 %v235, %v1627
    %v1633 = vadd.f32 %v236, %v1628
    %v1634 = vadd.f32 %v237, %v1629
    %1635 = vst [vmem:[#allocation11] sm:$0xff] %v1630
    %1636 = vst [vmem:[#allocation11 + $0x8] sm:$0xff] %v1631
    %1637 = vst [vmem:[#allocation11 + $0x10] sm:$0xff] %v1632
    %1638 = vst [vmem:[#allocation11 + $0x18] sm:$0xff] %v1633
    %1639 = vst [vmem:[#allocation11 + $0x20] sm:$0xff] %v1634
    // Predicated region
    $region62: #{tpu_custom_call.1} parent=1 // pred_check
      _
    $region63: #{tpu_custom_call.1} parent=1 // pred_check_branch
      %1641 = sbr.rel (0) target = $region65
    $region64: #{tpu_custom_call.1} parent=1 // pred_region
      %s1643 = ssub.s32 640, 640
      %1644 = vsyncadd [#allocation4], %s1643
      %s1645 = sshll.u32 [#allocation11], 4
      %s1646 = int_to_ptr.vmem [resolvable:$true] %s1645
      %1651 = dma.vmem_to_hbm [thread:$0]  %s1646, 640, %s10, [#allocation4], 128, 128, 8
    $region65: #{tpu_custom_call.1} parent=1 // pred_fallthru
      _
    // Predicated region
    $region66: #{tpu_custom_call.1} parent=1 // pred_check
      _
    $region67: #{tpu_custom_call.1} parent=1 // pred_check_branch
      %1653 = sbr.rel (0) target = $region69
    $region68: #{tpu_custom_call.1} parent=1 // pred_region
      %1654 = dma.done [#allocation4], 640
    $region69: #{tpu_custom_call.1} parent=1 // pred_fallthru
      _
    %1655 = vsyncpa [#allocation3], 1
    %1656 = vsyncpa [#allocation6], 1
    %1657 = vsyncpa [#allocation9], 1
    %1658 = vsyncpa [#allocation4], 1

</llo_original>
